<compile_context>
chip_gen: v7x
topology: tpu7x:2x2x1
jax: 0.10.0
libtpu: 0.0.40
codegen_flags: <defaults>
</compile_context>

<pallas_src>
import jax
import jax.numpy as jnp
from jax import lax
from jax.experimental import pallas as pl
from jax.experimental.pallas import tpu as pltpu

LEAKY_ALPHA = 0.01   # metapath_specific default alpha
NEG_INF = -1e30      # finite "minus infinity" (safe under 0 * x masking)


# ----------------------------------------------------------------------------
# Kernel A: RNN over metapath sequences + per-edge attention logits
# ----------------------------------------------------------------------------
def _rnn_logits_kernel(ed_ref, wih_ref, whh_ref, b_ref, attn_ref, eft_ref, a_ref):
    L, tE, D = ed_ref.shape

    # Hoist the input projection out of the recurrence: one (L*tE, D) @ (D, HD)
    # matmul instead of L tiny ones (fills the MXU, shortens the serial chain).
    x = ed_ref[...].reshape(L * tE, D)
    xp = jnp.dot(x, wih_ref[...], preferred_element_type=jnp.float32) + b_ref[...]

    # nn.RNN (tanh): h_t = tanh(x_t W_ih^T + b_ih + h_{t-1} W_hh^T + b_hh), h_0 = 0
    # Statically unrolled (L is small and fixed) so the scheduler can interleave.
    h = jnp.tanh(xp[0:tE, :])
    for t in range(1, L):
        h = jnp.tanh(xp[t * tE:(t + 1) * tE, :]
                     + jnp.dot(h, whh_ref[...], preferred_element_type=jnp.float32))

    eft_ref[...] = h                                                  # [tE, HD]
    # a[e, h] = sum_d eft[e, h, d] * attn[h, d]   (block-diagonal contraction)
    a = jnp.dot(h, attn_ref[...], preferred_element_type=jnp.float32)  # [tE, H]
    a_ref[...] = jnp.where(a > 0, a, LEAKY_ALPHA * a)                  # LeakyReLU(0.01)


def metapath_rnn_logits(edata, wih_T, whh_T, b, attn_expand, tE):
    M, L, E, D = edata.shape
    HD = whh_T.shape[-1]
    H = attn_expand.shape[-1]
    nE = E // tE
    return pl.pallas_call(
        _rnn_logits_kernel,
        out_shape=(jax.ShapeDtypeStruct((M, E, HD), jnp.float32),
                   jax.ShapeDtypeStruct((M, E, H), jnp.float32)),
        grid=(M, nE),
        in_specs=[
            pl.BlockSpec((None, L, tE, D), lambda m, e: (m, 0, e, 0)),
            pl.BlockSpec((None, D, HD), lambda m, e: (m, 0, 0)),
            pl.BlockSpec((None, HD, HD), lambda m, e: (m, 0, 0)),
            pl.BlockSpec((None, 1, HD), lambda m, e: (m, 0, 0)),
            pl.BlockSpec((None, HD, H), lambda m, e: (m, 0, 0)),
        ],
        out_specs=(pl.BlockSpec((None, tE, HD), lambda m, e: (m, e, 0)),
                   pl.BlockSpec((None, tE, H), lambda m, e: (m, e, 0))),
        compiler_params=pltpu.CompilerParams(
            dimension_semantics=("parallel", "parallel")),
    )(edata, wih_T, whh_T, b, attn_expand)


# ----------------------------------------------------------------------------
# Kernel B: edge softmax (per destination node) + weighted aggregation + elu
#   grid = (metapath, phase, edge-tile); phase 0: segment max, 1: segment sum
#   of exp(a - max), 2: attention weights + scatter-add into [H, N, D] acc.
# ----------------------------------------------------------------------------
def _edge_softmax_agg_kernel(dstc_ref, dstr_ref, a_ref, eft_ref, out_ref,
                             m_scr, d_scr, acc_scr):
    ph = pl.program_id(1)
    et = pl.program_id(2)
    last_et = pl.num_programs(2) - 1
    tE, H = a_ref.shape
    N = out_ref.shape[1]
    D = out_ref.shape[2]

    # Per-tile one-hot masks built in vregs from the int32 dst indices
    # (replaces the old dense [N, E] one-hot inputs entirely).
    lane_node = lax.broadcasted_iota(jnp.int32, (tE, N), 1)
    mask_en = lane_node == dstc_ref[...]                               # [tE, N]
    onehot_en = mask_en.astype(jnp.float32)
    row_node = lax.broadcasted_iota(jnp.int32, (N, tE), 0)
    onehot_ne = (row_node == dstr_ref[...]).astype(jnp.float32)        # [N, tE]

    a = a_ref[...]                                                     # [tE, H]

    @pl.when((ph == 0) & (et == 0))
    def _init():
        m_scr[...] = jnp.full(m_scr.shape, NEG_INF, jnp.float32)
        d_scr[...] = jnp.zeros(d_scr.shape, jnp.float32)
        acc_scr[...] = jnp.zeros(acc_scr.shape, jnp.float32)

    @pl.when(ph == 0)          # per-destination segment max (DGL edge_softmax)
    def _seg_max():
        for h in range(H):
            masked = jnp.where(mask_en, a[:, h:h + 1], NEG_INF)        # [tE, N]
            tile_max = jnp.max(masked, axis=0, keepdims=True)          # [1, N]
            m_scr[h:h + 1, :] = jnp.maximum(m_scr[h:h + 1, :], tile_max)

    @pl.when(ph == 1)          # per-destination sum of exp(a - max)
    def _seg_sum():
        for h in range(H):
            # gather m[dst[e], h] via mask-multiply + lane reduction (VPU/XLU)
            gm = jnp.sum(onehot_en * m_scr[h:h + 1, :], axis=1, keepdims=True)
            e_h = jnp.exp(a[:, h:h + 1] - gm)                          # [tE, 1]
            d_scr[h:h + 1, :] = d_scr[h:h + 1, :] + jnp.sum(
                onehot_en * e_h, axis=0, keepdims=True)                # [1, N]

    @pl.when(ph == 2)          # attention weights + weighted scatter-add
    def _aggregate():
        eft = eft_ref[...]                                             # [tE, HD]
        for h in range(H):
            gm = jnp.sum(onehot_en * m_scr[h:h + 1, :], axis=1, keepdims=True)
            gd = jnp.sum(onehot_en * d_scr[h:h + 1, :], axis=1, keepdims=True)
            inv = pl.reciprocal(gd, approx=True)                       # EUP
            inv = inv * (2.0 - gd * inv)                               # Newton step
            att_h = jnp.exp(a[:, h:h + 1] - gm) * inv                  # [tE, 1]
            # TODO(synk): nn.Dropout(attn_drop) on att_h skipped (inference mode).
            ft_h = eft[:, h * D:(h + 1) * D] * att_h                   # [tE, D]
            acc_scr[h] = acc_scr[h] + jnp.dot(
                onehot_ne, ft_h, preferred_element_type=jnp.float32)   # [N, D]

    @pl.when((ph == 2) & (et == last_et))
    def _finalize():
        r = acc_scr[...]
        # F.elu from the ntype_specific level, fused; clamp avoids exp overflow
        # on the discarded branch.
        out_ref[...] = jnp.where(r > 0, r, jnp.exp(jnp.minimum(r, 0.0)) - 1.0)


def edge_softmax_aggregate(dst_col, dst_row, a, eft, num_nodes, tE):
    M, E, H = a.shape
    HD = eft.shape[-1]
    D = HD // H
    N = num_nodes
    nE = E // tE
    return pl.pallas_call(
        _edge_softmax_agg_kernel,
        out_shape=jax.ShapeDtypeStruct((M, H, N, D), jnp.float32),
        grid=(M, 3, nE),
        in_specs=[
            pl.BlockSpec((None, tE, 1), lambda m, p, e: (m, e, 0)),
            pl.BlockSpec((None, 1, tE), lambda m, p, e: (m, 0, e)),
            pl.BlockSpec((None, tE, H), lambda m, p, e: (m, e, 0)),
            # eft is only consumed in phase 2; keep block 0 resident in the
            # max / denominator phases to avoid redundant DMA.
            pl.BlockSpec((None, tE, HD), lambda m, p, e: (m, e * (p // 2), 0)),
        ],
        out_specs=pl.BlockSpec((None, H, N, D), lambda m, p, e: (m, 0, 0, 0)),
        scratch_shapes=[pltpu.VMEM((H, N), jnp.float32),    # per-node max
                        pltpu.VMEM((H, N), jnp.float32),    # per-node denom
                        pltpu.VMEM((H, N, D), jnp.float32)],  # output accumulator
        compiler_params=pltpu.CompilerParams(
            dimension_semantics=("parallel", "arbitrary", "arbitrary")),
    )(dst_col, dst_row, a, eft)


# ----------------------------------------------------------------------------
# Kernel C: ntype attention fusion (batched fc1/tanh/mean/fc2, softmax, sum)
#   grid = (phase, node-tile); phase 0 accumulates per-metapath fc1 sums and
#   computes beta, phase 1 writes the beta-weighted sum per node-tile.
# ----------------------------------------------------------------------------
def ntype_attention(x, w1_T, b1_2d, w2_T, tN):
    M, N, HD = x.shape
    A = w1_T.shape[1]
    nN = N // tN
    inv_n = 1.0 / float(N)

    def kernel(x_ref, w1_ref, b1_ref, w2_ref, h_ref, beta_ref, s_ref):
        ph = pl.program_id(0)
        nt = pl.program_id(1)

        @pl.when((ph == 0) & (nt == 0))
        def _init():
            s_ref[...] = jnp.zeros(s_ref.shape, jnp.float32)

        @pl.when(ph == 0)
        def _accumulate():
            # all M fc1 projections batched into a single matmul
            x2 = x_ref[...].reshape(M * tN, HD)
            fc1 = jnp.tanh(jnp.dot(x2, w1_ref[...],
                                   preferred_element_type=jnp.float32) + b1_ref[...])
            for m in range(M):
                s_ref[m:m + 1, :] = s_ref[m:m + 1, :] + jnp.sum(
                    fc1[m * tN:(m + 1) * tN, :], axis=0, keepdims=True)

        @pl.when((ph == 0) & (nt == nN - 1))
        def _beta():
            logits = jnp.dot(s_ref[...], w2_ref[...],
                             preferred_element_type=jnp.float32) * inv_n   # [M, 1]
            mx = jnp.max(logits, axis=0, keepdims=True)
            ex = jnp.exp(logits - mx)
            tot = jnp.sum(ex, axis=0, keepdims=True)
            inv = pl.reciprocal(tot, approx=True)
            inv = inv * (2.0 - tot * inv)
            beta_ref[...] = ex * inv

        @pl.when(ph == 1)
        def _weighted_sum():
            acc = jnp.zeros((tN, HD), jnp.float32)
            for m in range(M):
                acc = acc + beta_ref[m:m + 1, :] * x_ref[m]
            h_ref[...] = acc

    return pl.pallas_call(
        kernel,
        out_shape=(jax.ShapeDtypeStruct((N, HD), jnp.float32),
                   jax.ShapeDtypeStruct((M, 1), jnp.float32)),
        grid=(2, nN),
        in_specs=[
            pl.BlockSpec((M, tN, HD), lambda p, n: (0, n, 0)),
            pl.BlockSpec((HD, A), lambda p, n: (0, 0)),
            pl.BlockSpec((1, A), lambda p, n: (0, 0)),
            pl.BlockSpec((A, 1), lambda p, n: (0, 0)),
        ],
        out_specs=(pl.BlockSpec((tN, HD), lambda p, n: (n * p, 0)),
                   pl.BlockSpec((M, 1), lambda p, n: (0, 0))),
        scratch_shapes=[pltpu.VMEM((M, A), jnp.float32)],
        compiler_params=pltpu.CompilerParams(
            dimension_semantics=("arbitrary", "arbitrary")),
    )(x, w1_T, b1_2d, w2_T)


# ----------------------------------------------------------------------------
# Full forward
# ----------------------------------------------------------------------------
def ntype_specific_forward(dst_list, features, indices_list, params, num_nodes,
                           tE=128, tN=32):
    M = len(indices_list)
    HD = params["whh_T"].shape[-1]
    # glue (host): F.embedding gather + stack metapaths into a leading batch dim
    edata = jnp.stack([features[idx] for idx in indices_list], axis=0)  # [M, E, L, D]
    edata = jnp.transpose(edata, (0, 2, 1, 3))                           # [M, L, E, D]
    dst = jnp.stack(dst_list, axis=0).astype(jnp.int32)                  # [M, E]

    eft, a = metapath_rnn_logits(edata, params["wih_T"], params["whh_T"],
                                 params["b"], params["attn_expand"], tE)
    xb = edge_softmax_aggregate(dst[:, :, None], dst[:, None, :], a, eft,
                                num_nodes, tE)                           # [M, H, N, D]
    x = jnp.transpose(xb, (0, 2, 1, 3)).reshape(M, num_nodes, HD)        # [M, N, HD]
    h, beta = ntype_attention(x, params["w1_T"], params["b1_2d"],
                              params["w2_T"], tN)
    return h, beta[:, :, None]                                           # (h, beta[M,1,1])


# ----------------------------------------------------------------------------
# Deterministic parameter init (synthetic; shapes from the module __init__)
# ----------------------------------------------------------------------------
def init_params(key, num_metapaths, out_dim, num_heads, attn_vec_dim):
    D, H = int(out_dim), int(num_heads)
    HD = H * D
    k_mp, k_w1, k_b1, k_w2 = jax.random.split(key, 4)
    eye = jnp.eye(H, dtype=jnp.float32)
    metapaths, wih_T, whh_T, bias, attn_expand = [], [], [], [], []
    for ki in jax.random.split(k_mp, num_metapaths):
        ks = jax.random.split(ki, 5)
        w_ih = 0.2 * jax.random.normal(ks[0], (HD, D), jnp.float32)
        w_hh = 0.2 * jax.random.normal(ks[1], (HD, HD), jnp.float32)
        b_ih = 0.1 * jax.random.normal(ks[2], (HD,), jnp.float32)
        b_hh = 0.1 * jax.random.normal(ks[3], (HD,), jnp.float32)
        attn = 0.3 * jax.random.normal(ks[4], (H, D), jnp.float32)
        metapaths.append(dict(w_ih=w_ih, w_hh=w_hh, b_ih=b_ih, b_hh=b_hh, attn=attn))
        wih_T.append(w_ih.T)
        whh_T.append(w_hh.T)
        bias.append((b_ih + b_hh)[None, :])
        # attn_expand[h*D + d, h] = attn[h, d]   (so a = eft_flat @ attn_expand)
        attn_expand.append((attn[:, :, None] * eye[:, None, :]).reshape(HD, H))
    w1 = 0.2 * jax.random.normal(k_w1, (attn_vec_dim, HD), jnp.float32)
    b1 = 0.1 * jax.random.normal(k_b1, (attn_vec_dim,), jnp.float32)
    w2 = 0.2 * jax.random.normal(k_w2, (1, attn_vec_dim), jnp.float32)
    return dict(metapaths=metapaths,
                wih_T=jnp.stack(wih_T), whh_T=jnp.stack(whh_T),
                b=jnp.stack(bias), attn_expand=jnp.stack(attn_expand),
                w1=w1, b1=b1, w2=w2,
                w1_T=w1.T, b1_2d=b1[None, :], w2_T=w2.T)


# ----------------------------------------------------------------------------
# Pure-JAX reference (segment ops) for a correctness check
# ----------------------------------------------------------------------------
def reference(dst_list, features, indices_list, params, num_nodes):
    outs = []
    for dst, idx, mp in zip(dst_list, indices_list, params["metapaths"]):
        edata = features[idx]                                   # [E, L, D]
        E, L, D = edata.shape
        HD = mp["w_hh"].shape[0]
        H = mp["attn"].shape[0]
        h = jnp.zeros((E, HD), jnp.float32)
        for t in range(L):
            h = jnp.tanh(edata[:, t] @ mp["w_ih"].T + mp["b_ih"]
                         + h @ mp["w_hh"].T + mp["b_hh"])
        eft = h.reshape(E, H, HD // H)
        a = (eft * mp["attn"][None]).sum(-1)                    # [E, H]
        a = jnp.where(a > 0, a, LEAKY_ALPHA * a)
        amax = jax.ops.segment_max(a, dst, num_segments=num_nodes)
        ea = jnp.exp(a - amax[dst])
        denom = jax.ops.segment_sum(ea, dst, num_segments=num_nodes)[dst]
        att = ea / denom
        ft = (eft * att[:, :, None]).reshape(E, HD)
        ret = jax.ops.segment_sum(ft, dst, num_segments=num_nodes)
        outs.append(jax.nn.elu(ret))
    X = jnp.stack(outs, 0)                                      # [M, N, HD]
    logits = []
    for m in range(X.shape[0]):
        fc1 = jnp.tanh(X[m] @ params["w1"].T + params["b1"])
        logits.append(fc1.mean(0) @ params["w2"].T)             # [1]
    beta = jax.nn.softmax(jnp.concatenate(logits, 0))           # [M]
    hfin = (beta[:, None, None] * X).sum(0)
    return hfin, beta[:, None, None]


if __name__ == "__main__":
    M, D, H, A = 3, 16, 2, 32          # num_metapaths, out_dim, num_heads, attn_vec_dim
    N, E, L = 64, 256, 4               # nodes, edges (metapath instances), metapath length
    TE, TN = 128, 32                   # edge tile, node tile

    key = jax.random.PRNGKey(0)
    k_feat, k_idx, k_dst, k_par = jax.random.split(key, 4)
    features = jax.random.normal(k_feat, (N, D), jnp.float32)
    indices_list = [jax.random.randint(k, (E, L), 0, N)
                    for k in jax.random.split(k_idx, M)]        # edge_metapath_indices
    dst_list = [jax.random.randint(k, (E,), 0, N)
                for k in jax.random.split(k_dst, M)]            # graph edge destinations
    params = init_params(k_par, M, D, H, A)

    h, beta = ntype_specific_forward(dst_list, features, indices_list, params, N,
                                     tE=TE, tN=TN)
    jax.block_until_ready((h, beta))

    h_ref, beta_ref = reference(dst_list, features, indices_list, params, N)
    # tolerance covers MXU vs XLA matmul accumulation-order / precision deltas
    assert jnp.allclose(h, h_ref, atol=1e-2, rtol=1e-2), float(jnp.max(jnp.abs(h - h_ref)))
    assert jnp.allclose(beta, beta_ref, atol=2e-3), float(jnp.max(jnp.abs(beta - beta_ref)))

    print("KERNEL_OK")
</pallas_src>

<mosaic_0001>
module attributes {stable_mosaic.version = 11 : i64} {
  func.func @_rnn_logits_kernel(%arg0: i32, %arg1: i32, %arg2: memref<1x4x128x16xf32, #tpu.memory_space<vmem>>, %arg3: memref<1x16x32xf32, #tpu.memory_space<vmem>>, %arg4: memref<1x32x32xf32, #tpu.memory_space<vmem>>, %arg5: memref<1x1x32xf32, #tpu.memory_space<vmem>>, %arg6: memref<1x32x2xf32, #tpu.memory_space<vmem>>, %arg7: memref<1x128x32xf32, #tpu.memory_space<vmem>>, %arg8: memref<1x128x2xf32, #tpu.memory_space<vmem>>) attributes {dimension_semantics = [#tpu.dimension_semantics<parallel>, #tpu.dimension_semantics<parallel>], iteration_bounds = array<i64: 3, 2>, scalar_prefetch = 0 : i64, scratch_operands = 0 : i64, tpu.core_type = #tpu.core_type<tc>, window_params = [{transform_indices = @transform_0, window_bounds = array<i64: 1, 4, 128, 16>}, {transform_indices = @transform_1, window_bounds = array<i64: 1, 16, 32>}, {transform_indices = @transform_2, window_bounds = array<i64: 1, 32, 32>}, {transform_indices = @transform_3, window_bounds = array<i64: 1, 1, 32>}, {transform_indices = @transform_4, window_bounds = array<i64: 1, 32, 2>}, {transform_indices = @transform_5, window_bounds = array<i64: 1, 128, 32>}, {transform_indices = @transform_6, window_bounds = array<i64: 1, 128, 2>}]} {
    %c0 = arith.constant 0 : index
    %c0_0 = arith.constant 0 : index
    %c0_1 = arith.constant 0 : index
    %c0_2 = arith.constant 0 : index
    %0 = vector.load %arg2[%c0, %c0_0, %c0_1, %c0_2] : memref<1x4x128x16xf32, #tpu.memory_space<vmem>>, vector<1x4x128x16xf32>
    %1 = vector.shape_cast %0 : vector<1x4x128x16xf32> to vector<4x128x16xf32>
    %2 = vector.shape_cast %1 : vector<4x128x16xf32> to vector<512x16xf32>
    %c0_3 = arith.constant 0 : index
    %c0_4 = arith.constant 0 : index
    %c0_5 = arith.constant 0 : index
    %3 = vector.load %arg3[%c0_3, %c0_4, %c0_5] : memref<1x16x32xf32, #tpu.memory_space<vmem>>, vector<1x16x32xf32>
    %4 = vector.shape_cast %3 : vector<1x16x32xf32> to vector<16x32xf32>
    %cst = arith.constant dense<0.000000e+00> : vector<512x32xf32>
    %5 = tpu.matmul %2, %4, %cst {dimension_numbers = #tpu.dot_dimension_numbers<[1], [0], [0], [1], [0, 0, 1, 1], [], []>} : vector<512x16xf32>, vector<16x32xf32>, vector<512x32xf32> -> vector<512x32xf32>
    %c0_6 = arith.constant 0 : index
    %c0_7 = arith.constant 0 : index
    %c0_8 = arith.constant 0 : index
    %6 = vector.load %arg5[%c0_6, %c0_7, %c0_8] : memref<1x1x32xf32, #tpu.memory_space<vmem>>, vector<1x1x32xf32>
    %7 = vector.shape_cast %6 : vector<1x1x32xf32> to vector<1x32xf32>
    %8 = vector.broadcast %7 : vector<1x32xf32> to vector<512x32xf32>
    %9 = arith.addf %5, %8 : vector<512x32xf32>
    %10 = vector.extract_strided_slice %9 {offsets = [0, 0], sizes = [128, 32], strides = [1, 1]} : vector<512x32xf32> to vector<128x32xf32>
    %11 = math.tanh %10 : vector<128x32xf32>
    %12 = vector.extract_strided_slice %9 {offsets = [128, 0], sizes = [128, 32], strides = [1, 1]} : vector<512x32xf32> to vector<128x32xf32>
    %c0_9 = arith.constant 0 : index
    %c0_10 = arith.constant 0 : index
    %c0_11 = arith.constant 0 : index
    %13 = vector.load %arg4[%c0_9, %c0_10, %c0_11] : memref<1x32x32xf32, #tpu.memory_space<vmem>>, vector<1x32x32xf32>
    %14 = vector.shape_cast %13 : vector<1x32x32xf32> to vector<32x32xf32>
    %cst_12 = arith.constant dense<0.000000e+00> : vector<128x32xf32>
    %15 = tpu.matmul %11, %14, %cst_12 {dimension_numbers = #tpu.dot_dimension_numbers<[1], [0], [0], [1], [0, 0, 1, 1], [], []>} : vector<128x32xf32>, vector<32x32xf32>, vector<128x32xf32> -> vector<128x32xf32>
    %16 = arith.addf %12, %15 : vector<128x32xf32>
    %17 = math.tanh %16 : vector<128x32xf32>
    %18 = vector.extract_strided_slice %9 {offsets = [256, 0], sizes = [128, 32], strides = [1, 1]} : vector<512x32xf32> to vector<128x32xf32>
    %c0_13 = arith.constant 0 : index
    %c0_14 = arith.constant 0 : index
    %c0_15 = arith.constant 0 : index
    %19 = vector.load %arg4[%c0_13, %c0_14, %c0_15] : memref<1x32x32xf32, #tpu.memory_space<vmem>>, vector<1x32x32xf32>
    %20 = vector.shape_cast %19 : vector<1x32x32xf32> to vector<32x32xf32>
    %cst_16 = arith.constant dense<0.000000e+00> : vector<128x32xf32>
    %21 = tpu.matmul %17, %20, %cst_16 {dimension_numbers = #tpu.dot_dimension_numbers<[1], [0], [0], [1], [0, 0, 1, 1], [], []>} : vector<128x32xf32>, vector<32x32xf32>, vector<128x32xf32> -> vector<128x32xf32>
    %22 = arith.addf %18, %21 : vector<128x32xf32>
    %23 = math.tanh %22 : vector<128x32xf32>
    %24 = vector.extract_strided_slice %9 {offsets = [384, 0], sizes = [128, 32], strides = [1, 1]} : vector<512x32xf32> to vector<128x32xf32>
    %c0_17 = arith.constant 0 : index
    %c0_18 = arith.constant 0 : index
    %c0_19 = arith.constant 0 : index
    %25 = vector.load %arg4[%c0_17, %c0_18, %c0_19] : memref<1x32x32xf32, #tpu.memory_space<vmem>>, vector<1x32x32xf32>
    %26 = vector.shape_cast %25 : vector<1x32x32xf32> to vector<32x32xf32>
    %cst_20 = arith.constant dense<0.000000e+00> : vector<128x32xf32>
    %27 = tpu.matmul %23, %26, %cst_20 {dimension_numbers = #tpu.dot_dimension_numbers<[1], [0], [0], [1], [0, 0, 1, 1], [], []>} : vector<128x32xf32>, vector<32x32xf32>, vector<128x32xf32> -> vector<128x32xf32>
    %28 = arith.addf %24, %27 : vector<128x32xf32>
    %29 = math.tanh %28 : vector<128x32xf32>
    %c0_21 = arith.constant 0 : index
    %c0_22 = arith.constant 0 : index
    %c0_23 = arith.constant 0 : index
    %30 = vector.load %arg7[%c0_21, %c0_22, %c0_23] : memref<1x128x32xf32, #tpu.memory_space<vmem>>, vector<1x128x32xf32>
    %31 = vector.shape_cast %30 : vector<1x128x32xf32> to vector<128x32xf32>
    %32 = vector.shape_cast %29 : vector<128x32xf32> to vector<1x128x32xf32>
    tpu.vector_store %arg7[%c0_21, %c0_22, %c0_23], %32 {strides = array<i32>} : memref<1x128x32xf32, #tpu.memory_space<vmem>>, vector<1x128x32xf32>,
    %c0_24 = arith.constant 0 : index
    %c0_25 = arith.constant 0 : index
    %c0_26 = arith.constant 0 : index
    %33 = vector.load %arg6[%c0_24, %c0_25, %c0_26] : memref<1x32x2xf32, #tpu.memory_space<vmem>>, vector<1x32x2xf32>
    %34 = vector.shape_cast %33 : vector<1x32x2xf32> to vector<32x2xf32>
    %cst_27 = arith.constant dense<0.000000e+00> : vector<128x2xf32>
    %35 = tpu.matmul %29, %34, %cst_27 {dimension_numbers = #tpu.dot_dimension_numbers<[1], [0], [0], [1], [0, 0, 1, 1], [], []>} : vector<128x32xf32>, vector<32x2xf32>, vector<128x2xf32> -> vector<128x2xf32>
    %cst_28 = arith.constant 0.000000e+00 : f32
    %36 = vector.broadcast %cst_28 : f32 to vector<128x2xf32>
    %37 = arith.cmpf ogt, %35, %36 : vector<128x2xf32>
    %cst_29 = arith.constant 0.00999999977 : f32
    %38 = vector.broadcast %cst_29 : f32 to vector<128x2xf32>
    %39 = arith.mulf %38, %35 : vector<128x2xf32>
    %40 = arith.select %37, %35, %39 : vector<128x2xi1>, vector<128x2xf32>
    %c0_30 = arith.constant 0 : index
    %c0_31 = arith.constant 0 : index
    %c0_32 = arith.constant 0 : index
    %41 = vector.load %arg8[%c0_30, %c0_31, %c0_32] : memref<1x128x2xf32, #tpu.memory_space<vmem>>, vector<1x128x2xf32>
    %42 = vector.shape_cast %41 : vector<1x128x2xf32> to vector<128x2xf32>
    %43 = vector.shape_cast %40 : vector<128x2xf32> to vector<1x128x2xf32>
    tpu.vector_store %arg8[%c0_30, %c0_31, %c0_32], %43 {strides = array<i32>} : memref<1x128x2xf32, #tpu.memory_space<vmem>>, vector<1x128x2xf32>,
    return
  }
  func.func @transform_0(%arg0: i32, %arg1: i32) -> (i32, i32, i32, i32) {
    %c0_i32 = arith.constant 0 : i32
    %c0_i32_0 = arith.constant 0 : i32
    %c0_i32_1 = arith.constant 0 : i32
    return %arg0, %c0_i32, %arg1, %c0_i32_0 : i32, i32, i32, i32
  }
  func.func @transform_1(%arg0: i32, %arg1: i32) -> (i32, i32, i32) {
    %c0_i32 = arith.constant 0 : i32
    %c0_i32_0 = arith.constant 0 : i32
    %c0_i32_1 = arith.constant 0 : i32
    return %arg0, %c0_i32, %c0_i32_0 : i32, i32, i32
  }
  func.func @transform_2(%arg0: i32, %arg1: i32) -> (i32, i32, i32) {
    %c0_i32 = arith.constant 0 : i32
    %c0_i32_0 = arith.constant 0 : i32
    %c0_i32_1 = arith.constant 0 : i32
    return %arg0, %c0_i32, %c0_i32_0 : i32, i32, i32
  }
  func.func @transform_3(%arg0: i32, %arg1: i32) -> (i32, i32, i32) {
    %c0_i32 = arith.constant 0 : i32
    %c0_i32_0 = arith.constant 0 : i32
    %c0_i32_1 = arith.constant 0 : i32
    return %arg0, %c0_i32, %c0_i32_0 : i32, i32, i32
  }
  func.func @transform_4(%arg0: i32, %arg1: i32) -> (i32, i32, i32) {
    %c0_i32 = arith.constant 0 : i32
    %c0_i32_0 = arith.constant 0 : i32
    %c0_i32_1 = arith.constant 0 : i32
    return %arg0, %c0_i32, %c0_i32_0 : i32, i32, i32
  }
  func.func @transform_5(%arg0: i32, %arg1: i32) -> (i32, i32, i32) {
    %c0_i32 = arith.constant 0 : i32
    %c0_i32_0 = arith.constant 0 : i32
    return %arg0, %arg1, %c0_i32 : i32, i32, i32
  }
  func.func @transform_6(%arg0: i32, %arg1: i32) -> (i32, i32, i32) {
    %c0_i32 = arith.constant 0 : i32
    %c0_i32_0 = arith.constant 0 : i32
    return %arg0, %arg1, %c0_i32 : i32, i32, i32
  }
}

</mosaic_0001>

<llo_original>
// kernel: tpu_custom_call.1
$region0: #{tpu_custom_call.1}
  #allocation0 [shape = 'u32[]', space=smem, size = 0x4, offset = 0x4, fixed_abs, tag = 'smem constant byte address 0x4 - core index']
  #allocation1 [shape = 'u32[144,128]{1,0:T(1,128)}', space=vmem, size = 0x12000, scoped, tag = 'internal scratch']
  %s0 = inlined_call_operand.vmem [shape: f32[3,4,256,16], index: 0, kind: input, shape index: {}]
  %s1 = inlined_call_operand.vmem [shape: f32[3,16,32], index: 1, kind: input, shape index: {}]
  %s2 = inlined_call_operand.vmem [shape: f32[3,32,32], index: 2, kind: input, shape index: {}]
  %s3 = inlined_call_operand.vmem [shape: f32[3,1,32], index: 3, kind: input, shape index: {}]
  %s4 = inlined_call_operand.vmem [shape: f32[3,32,2], index: 4, kind: input, shape index: {}]
  %s5 = inlined_call_operand.vmem [shape: f32[3,256,32], index: 5, kind: output, shape index: {0}]
  %s6 = inlined_call_operand.vmem [shape: f32[3,256,2], index: 6, kind: output, shape index: {1}]
  %7 = xla_tuple %s5, %s6
  %s8 = sld [smem:[#allocation0]]
  $region99: #{tpu_custom_call.1} parent=0
    _
  %s10 = ssub.s32 1, %s8
  %s11 = scalar_select 0, %s10, %s8
  $region1: #{tpu_custom_call.1} parent=0
    #allocation2 [shape = 'u8[524288]{0}', space=vmem, size = 0x80000, scoped, tag = 'input window, operand 0']
    loop: start=0, step=1, limit=8
    $region2: #{tpu_custom_call.1} parent=1 // loop_pre_header
      _
    $region3: #{tpu_custom_call.1} parent=1 // loop_header
      %s13 = sphi 0, %s17
      %p14 = scmp.ge.s32.totalorder %s13, 8
      %s20 = sphi 0, %s32
      %s21 = sphi 0, %s28
      %s22 = sphi 0, %s20
      %s23 = sphi 0, %s21
      %s24 = sphi 0, %s22
      %s25 = sphi 0, %s23
      %s37 = sphi 0, %s39
      %s40 = sphi 0, %s37
      %s41 = sphi 0, %s40
      %s57 = sphi 0, %s41
      %s63 = sphi 0, %s65
      %s66 = sphi 0, %s63
      %s67 = sphi 0, %s66
      %s83 = sphi 0, %s67
      %s89 = sphi 0, %s91
      %s92 = sphi 0, %s89
      %s93 = sphi 0, %s92
      %s109 = sphi 0, %s93
      %s115 = sphi 0, %s117
      %s118 = sphi 0, %s115
      %s119 = sphi 0, %s118
      %s135 = sphi 0, %s119
      %s141 = sphi 0, %s143
      %s144 = sphi 0, %s141
      %s145 = sphi 0, %s144
      %s161 = sphi 0, %s145
      %s169 = sphi 0, %s171
      %s172 = sphi 0, %s169
      %s173 = sphi 0, %s172
      %s189 = sphi 0, %s173
      %s197 = sphi 0, %s199
      %s200 = sphi 0, %s197
      %s201 = sphi 0, %s200
      %s217 = sphi 0, %s201
    $region4: #{tpu_custom_call.1} parent=1 // loop_header_branch
      %16 = sbr.rel (%p14) target = $region8
    $region5: #{tpu_custom_call.1} parent=1 // loop_body
      %s18 = ssub.s32 %s13, 1
      %s19 = ssub.s32 %s13, 2
      %s26 = sadd.s32 1, %s21
      %p27 = scmp.ge.s32.totalorder %s26, 2
      %s28 = scalar_select %p27, 0, %s26
      %s29 = sadd.s32 1, %s20
      %s30 = scalar_select %p27, %s29, %s20
      %p31 = scmp.ge.s32.totalorder %s30, 3
      %s32 = scalar_select %p31, 0, %s30
      %s33 = ssub.s32 %s20, %s32
      %s34 = ssub.s32 %s21, %s28
      %s35 = sor.u32 %s33, %s34
      %p36 = scmp.eq.s32.totalorder %s35, 0
      %s38 = sadd.s32 %s37, 1
      %s39 = scalar_select %p36, %s37, %s38
      %p42 = pneg %p36
      %p43 = scmp.eq.s32.totalorder %s13, 5
      %p44 = por %p42, %p43
      %p45 = scmp.ne.s32.totalorder %s37, %s40
      %p46 = scmp.eq.s32.totalorder %s13, 0
      %p47 = por %p45, %p46
      %p48 = scmp.ne.s32.totalorder %s37, %s40
      %p49 = scmp.eq.s32.totalorder %s18, 5
      %p50 = por %p48, %p49
      %p51 = scmp.ne.s32.totalorder %s40, %s41
      %p52 = scmp.eq.s32.totalorder %s18, 0
      %p53 = por %p51, %p52
      %p54 = scmp.ne.s32.totalorder %s40, %s41
      %p55 = scmp.eq.s32.totalorder %s19, 5
      %p56 = por %p54, %p55
      %p58 = scmp.ne.s32.totalorder %s41, %s57
      %p59 = scmp.eq.s32.totalorder %s19, 0
      %p60 = por %p58, %p59
      %s61 = ssub.s32 %s20, %s32
      %p62 = scmp.eq.s32.totalorder %s61, 0
      %s64 = sadd.s32 %s63, 1
      %s65 = scalar_select %p62, %s63, %s64
      %p68 = pneg %p62
      %p69 = scmp.eq.s32.totalorder %s13, 5
      %p70 = por %p68, %p69
      %p71 = scmp.ne.s32.totalorder %s63, %s66
      %p72 = scmp.eq.s32.totalorder %s13, 0
      %p73 = por %p71, %p72
      %p74 = scmp.ne.s32.totalorder %s63, %s66
      %p75 = scmp.eq.s32.totalorder %s18, 5
      %p76 = por %p74, %p75
      %p77 = scmp.ne.s32.totalorder %s66, %s67
      %p78 = scmp.eq.s32.totalorder %s18, 0
      %p79 = por %p77, %p78
      %p80 = scmp.ne.s32.totalorder %s66, %s67
      %p81 = scmp.eq.s32.totalorder %s19, 5
      %p82 = por %p80, %p81
      %p84 = scmp.ne.s32.totalorder %s67, %s83
      %p85 = scmp.eq.s32.totalorder %s19, 0
      %p86 = por %p84, %p85
      %s87 = ssub.s32 %s20, %s32
      %p88 = scmp.eq.s32.totalorder %s87, 0
      %s90 = sadd.s32 %s89, 1
      %s91 = scalar_select %p88, %s89, %s90
      %p94 = pneg %p88
      %p95 = scmp.eq.s32.totalorder %s13, 5
      %p96 = por %p94, %p95
      %p97 = scmp.ne.s32.totalorder %s89, %s92
      %p98 = scmp.eq.s32.totalorder %s13, 0
      %p99 = por %p97, %p98
      %p100 = scmp.ne.s32.totalorder %s89, %s92
      %p101 = scmp.eq.s32.totalorder %s18, 5
      %p102 = por %p100, %p101
      %p103 = scmp.ne.s32.totalorder %s92, %s93
      %p104 = scmp.eq.s32.totalorder %s18, 0
      %p105 = por %p103, %p104
      %p106 = scmp.ne.s32.totalorder %s92, %s93
      %p107 = scmp.eq.s32.totalorder %s19, 5
      %p108 = por %p106, %p107
      %p110 = scmp.ne.s32.totalorder %s93, %s109
      %p111 = scmp.eq.s32.totalorder %s19, 0
      %p112 = por %p110, %p111
      %s113 = ssub.s32 %s20, %s32
      %p114 = scmp.eq.s32.totalorder %s113, 0
      %s116 = sadd.s32 %s115, 1
      %s117 = scalar_select %p114, %s115, %s116
      %p120 = pneg %p114
      %p121 = scmp.eq.s32.totalorder %s13, 5
      %p122 = por %p120, %p121
      %p123 = scmp.ne.s32.totalorder %s115, %s118
      %p124 = scmp.eq.s32.totalorder %s13, 0
      %p125 = por %p123, %p124
      %p126 = scmp.ne.s32.totalorder %s115, %s118
      %p127 = scmp.eq.s32.totalorder %s18, 5
      %p128 = por %p126, %p127
      %p129 = scmp.ne.s32.totalorder %s118, %s119
      %p130 = scmp.eq.s32.totalorder %s18, 0
      %p131 = por %p129, %p130
      %p132 = scmp.ne.s32.totalorder %s118, %s119
      %p133 = scmp.eq.s32.totalorder %s19, 5
      %p134 = por %p132, %p133
      %p136 = scmp.ne.s32.totalorder %s119, %s135
      %p137 = scmp.eq.s32.totalorder %s19, 0
      %p138 = por %p136, %p137
      %s139 = ssub.s32 %s20, %s32
      %p140 = scmp.eq.s32.totalorder %s139, 0
      %s142 = sadd.s32 %s141, 1
      %s143 = scalar_select %p140, %s141, %s142
      %p146 = pneg %p140
      %p147 = scmp.eq.s32.totalorder %s13, 5
      %p148 = por %p146, %p147
      %p149 = scmp.ne.s32.totalorder %s141, %s144
      %p150 = scmp.eq.s32.totalorder %s13, 0
      %p151 = por %p149, %p150
      %p152 = scmp.ne.s32.totalorder %s141, %s144
      %p153 = scmp.eq.s32.totalorder %s18, 5
      %p154 = por %p152, %p153
      %p155 = scmp.ne.s32.totalorder %s144, %s145
      %p156 = scmp.eq.s32.totalorder %s18, 0
      %p157 = por %p155, %p156
      %p158 = scmp.ne.s32.totalorder %s144, %s145
      %p159 = scmp.eq.s32.totalorder %s19, 5
      %p160 = por %p158, %p159
      %p162 = scmp.ne.s32.totalorder %s145, %s161
      %p163 = scmp.eq.s32.totalorder %s19, 0
      %p164 = por %p162, %p163
      %s165 = ssub.s32 %s20, %s32
      %s166 = ssub.s32 %s21, %s28
      %s167 = sor.u32 %s165, %s166
      %p168 = scmp.eq.s32.totalorder %s167, 0
      %s170 = sadd.s32 %s169, 1
      %s171 = scalar_select %p168, %s169, %s170
      %p174 = pneg %p168
      %p175 = scmp.eq.s32.totalorder %s13, 5
      %p176 = por %p174, %p175
      %p177 = scmp.ne.s32.totalorder %s169, %s172
      %p178 = scmp.eq.s32.totalorder %s13, 0
      %p179 = por %p177, %p178
      %p180 = scmp.ne.s32.totalorder %s169, %s172
      %p181 = scmp.eq.s32.totalorder %s18, 5
      %p182 = por %p180, %p181
      %p183 = scmp.ne.s32.totalorder %s172, %s173
      %p184 = scmp.eq.s32.totalorder %s18, 0
      %p185 = por %p183, %p184
      %p186 = scmp.ne.s32.totalorder %s172, %s173
      %p187 = scmp.eq.s32.totalorder %s19, 5
      %p188 = por %p186, %p187
      %p190 = scmp.ne.s32.totalorder %s173, %s189
      %p191 = scmp.eq.s32.totalorder %s19, 0
      %p192 = por %p190, %p191
      %s193 = ssub.s32 %s20, %s32
      %s194 = ssub.s32 %s21, %s28
      %s195 = sor.u32 %s193, %s194
      %p196 = scmp.eq.s32.totalorder %s195, 0
      %s198 = sadd.s32 %s197, 1
      %s199 = scalar_select %p196, %s197, %s198
      %p202 = pneg %p196
      %p203 = scmp.eq.s32.totalorder %s13, 5
      %p204 = por %p202, %p203
      %p205 = scmp.ne.s32.totalorder %s197, %s200
      %p206 = scmp.eq.s32.totalorder %s13, 0
      %p207 = por %p205, %p206
      %p208 = scmp.ne.s32.totalorder %s197, %s200
      %p209 = scmp.eq.s32.totalorder %s18, 5
      %p210 = por %p208, %p209
      %p211 = scmp.ne.s32.totalorder %s200, %s201
      %p212 = scmp.eq.s32.totalorder %s18, 0
      %p213 = por %p211, %p212
      %p214 = scmp.ne.s32.totalorder %s200, %s201
      %p215 = scmp.eq.s32.totalorder %s19, 5
      %p216 = por %p214, %p215
      %p218 = scmp.ne.s32.totalorder %s201, %s217
      %p219 = scmp.eq.s32.totalorder %s19, 0
      %p220 = por %p218, %p219
      %p221 = scmp.le.s32.totalorder 1, %s13
      %p222 = scmp.lt.s32.totalorder %s13, 7
      %p223 = pnand %p221, %p222
      %p224 = pneg %p223
      // Predicated region
      $region9: #{tpu_custom_call.1} parent=5 // pred_check
        _
      $region10: #{tpu_custom_call.1} parent=5 // pred_check_branch
        %226 = sbr.rel (%p223) target = $region12
      $region11: #{tpu_custom_call.1} parent=5 // pred_region
        %s227 = ssub.s32 %s13, 1
      $region12: #{tpu_custom_call.1} parent=5 // pred_fallthru
        _
      %p228 = scmp.lt.s32.totalorder %s13, 6
      // Predicated region
      $region13: #{tpu_custom_call.1} parent=5 // pred_check
        %p229 = pneg %p228
      $region14: #{tpu_custom_call.1} parent=5 // pred_check_branch
        %231 = sbr.rel (%p229) target = $region16
      $region15: #{tpu_custom_call.1} parent=5 // pred_region
        // Predicated region
        $region17: #{tpu_custom_call.1} parent=15 // pred_check
          %p232 = pneg %p47
        $region18: #{tpu_custom_call.1} parent=15 // pred_check_branch
          %234 = sbr.rel (%p232) target = $region20
        $region19: #{tpu_custom_call.1} parent=15 // pred_region
          %s235 = sand.u32 %s37, 1
          %s236 = sand.u32 %s37, 1
          %s237 = smul.addr %s236, 512
          %s238 = scalar_lea.vmem [#allocation2], %s237
          %s239 = smul.u32 16, %s21
          %s240 = smul.addr %s20, 128
          %s241 = sadd.s32 %s239, %s240
          %s242 = smul.addr %s241, 8
          %s243 = scalar_lea.vmem %s0, %s242
          // Predicated region
          $region21: #{tpu_custom_call.1} parent=19 // pred_check
            _
          $region22: #{tpu_custom_call.1} parent=19 // pred_check_branch
            %245 = sbr.rel (0) target = $region24
          $region23: #{tpu_custom_call.1} parent=19 // pred_region
            // Predicated region
            $region25: #{tpu_custom_call.1} parent=23 // pred_check
              _
            $region26: #{tpu_custom_call.1} parent=23 // pred_check_branch
              %247 = sbr.rel (0) target = $region28
            $region27: #{tpu_custom_call.1} parent=23 // pred_region
              // Predicated region
              $region40: #{tpu_custom_call.1} parent=27 // pred_check
                _
              $region41: #{tpu_custom_call.1} parent=27 // pred_check_branch
                %388 = sbr.rel (0) target = $region43
              $region42: #{tpu_custom_call.1} parent=27 // pred_region
                loop: start=0, step=1, limit=1
                $region44: #{tpu_custom_call.1} parent=42 // loop_pre_header
                  _
                $region45: #{tpu_custom_call.1} parent=42 // loop_header
                  %s390 = sphi 0, %s394
                  %p391 = scmp.ge.s32.totalorder %s390, 1
                  %s395 = sphi %s243, %s243
                  %s396 = sphi %s238, %s238
                $region46: #{tpu_custom_call.1} parent=42 // loop_header_branch
                  %393 = sbr.rel (%p391) target = $region50
                $region47: #{tpu_custom_call.1} parent=42 // loop_body
                  %v397 = vld [vmem:[%s395] sm:$0xff]
                  %398 = vst [vmem:[%s396] sm:$0xff] %v397
                  %v399 = vld [vmem:[%s395 + $0x8] sm:$0xff]
                  %400 = vst [vmem:[%s396 + $0x8] sm:$0xff] %v399
                  %v401 = vld [vmem:[%s395 + $0x10] sm:$0xff]
                  %402 = vst [vmem:[%s396 + $0x10] sm:$0xff] %v401
                  %v403 = vld [vmem:[%s395 + $0x18] sm:$0xff]
                  %404 = vst [vmem:[%s396 + $0x18] sm:$0xff] %v403
                  %v405 = vld [vmem:[%s395 + $0x20] sm:$0xff]
                  %406 = vst [vmem:[%s396 + $0x20] sm:$0xff] %v405
                  %v407 = vld [vmem:[%s395 + $0x28] sm:$0xff]
                  %408 = vst [vmem:[%s396 + $0x28] sm:$0xff] %v407
                  %v409 = vld [vmem:[%s395 + $0x30] sm:$0xff]
                  %410 = vst [vmem:[%s396 + $0x30] sm:$0xff] %v409
                  %v411 = vld [vmem:[%s395 + $0x38] sm:$0xff]
                  %412 = vst [vmem:[%s396 + $0x38] sm:$0xff] %v411
                  %v413 = vld [vmem:[%s395 + $0x40] sm:$0xff]
                  %414 = vst [vmem:[%s396 + $0x40] sm:$0xff] %v413
                  %v415 = vld [vmem:[%s395 + $0x48] sm:$0xff]
                  %416 = vst [vmem:[%s396 + $0x48] sm:$0xff] %v415
                  %v417 = vld [vmem:[%s395 + $0x50] sm:$0xff]
                  %418 = vst [vmem:[%s396 + $0x50] sm:$0xff] %v417
                  %v419 = vld [vmem:[%s395 + $0x58] sm:$0xff]
                  %420 = vst [vmem:[%s396 + $0x58] sm:$0xff] %v419
                  %v421 = vld [vmem:[%s395 + $0x60] sm:$0xff]
                  %422 = vst [vmem:[%s396 + $0x60] sm:$0xff] %v421
                  %v423 = vld [vmem:[%s395 + $0x68] sm:$0xff]
                  %424 = vst [vmem:[%s396 + $0x68] sm:$0xff] %v423
                  %v425 = vld [vmem:[%s395 + $0x70] sm:$0xff]
                  %426 = vst [vmem:[%s396 + $0x70] sm:$0xff] %v425
                  %v427 = vld [vmem:[%s395 + $0x78] sm:$0xff]
                  %428 = vst [vmem:[%s396 + $0x78] sm:$0xff] %v427
                  %v429 = vld [vmem:[%s395 + $0x100] sm:$0xff]
                  %430 = vst [vmem:[%s396 + $0x80] sm:$0xff] %v429
                  %v431 = vld [vmem:[%s395 + $0x108] sm:$0xff]
                  %432 = vst [vmem:[%s396 + $0x88] sm:$0xff] %v431
                  %v433 = vld [vmem:[%s395 + $0x110] sm:$0xff]
                  %434 = vst [vmem:[%s396 + $0x90] sm:$0xff] %v433
                  %v435 = vld [vmem:[%s395 + $0x118] sm:$0xff]
                  %436 = vst [vmem:[%s396 + $0x98] sm:$0xff] %v435
                  %v437 = vld [vmem:[%s395 + $0x120] sm:$0xff]
                  %438 = vst [vmem:[%s396 + $0xa0] sm:$0xff] %v437
                  %v439 = vld [vmem:[%s395 + $0x128] sm:$0xff]
                  %440 = vst [vmem:[%s396 + $0xa8] sm:$0xff] %v439
                  %v441 = vld [vmem:[%s395 + $0x130] sm:$0xff]
                  %442 = vst [vmem:[%s396 + $0xb0] sm:$0xff] %v441
                  %v443 = vld [vmem:[%s395 + $0x138] sm:$0xff]
                  %444 = vst [vmem:[%s396 + $0xb8] sm:$0xff] %v443
                  %v445 = vld [vmem:[%s395 + $0x140] sm:$0xff]
                  %446 = vst [vmem:[%s396 + $0xc0] sm:$0xff] %v445
                  %v447 = vld [vmem:[%s395 + $0x148] sm:$0xff]
                  %448 = vst [vmem:[%s396 + $0xc8] sm:$0xff] %v447
                  %v449 = vld [vmem:[%s395 + $0x150] sm:$0xff]
                  %450 = vst [vmem:[%s396 + $0xd0] sm:$0xff] %v449
                  %v451 = vld [vmem:[%s395 + $0x158] sm:$0xff]
                  %452 = vst [vmem:[%s396 + $0xd8] sm:$0xff] %v451
                  %v453 = vld [vmem:[%s395 + $0x160] sm:$0xff]
                  %454 = vst [vmem:[%s396 + $0xe0] sm:$0xff] %v453
                  %v455 = vld [vmem:[%s395 + $0x168] sm:$0xff]
                  %456 = vst [vmem:[%s396 + $0xe8] sm:$0xff] %v455
                  %v457 = vld [vmem:[%s395 + $0x170] sm:$0xff]
                  %458 = vst [vmem:[%s396 + $0xf0] sm:$0xff] %v457
                  %v459 = vld [vmem:[%s395 + $0x178] sm:$0xff]
                  %460 = vst [vmem:[%s396 + $0xf8] sm:$0xff] %v459
                  %v461 = vld [vmem:[%s395 + $0x200] sm:$0xff]
                  %462 = vst [vmem:[%s396 + $0x100] sm:$0xff] %v461
                  %v463 = vld [vmem:[%s395 + $0x208] sm:$0xff]
                  %464 = vst [vmem:[%s396 + $0x108] sm:$0xff] %v463
                  %v465 = vld [vmem:[%s395 + $0x210] sm:$0xff]
                  %466 = vst [vmem:[%s396 + $0x110] sm:$0xff] %v465
                  %v467 = vld [vmem:[%s395 + $0x218] sm:$0xff]
                  %468 = vst [vmem:[%s396 + $0x118] sm:$0xff] %v467
                  %v469 = vld [vmem:[%s395 + $0x220] sm:$0xff]
                  %470 = vst [vmem:[%s396 + $0x120] sm:$0xff] %v469
                  %v471 = vld [vmem:[%s395 + $0x228] sm:$0xff]
                  %472 = vst [vmem:[%s396 + $0x128] sm:$0xff] %v471
                  %v473 = vld [vmem:[%s395 + $0x230] sm:$0xff]
                  %474 = vst [vmem:[%s396 + $0x130] sm:$0xff] %v473
                  %v475 = vld [vmem:[%s395 + $0x238] sm:$0xff]
                  %476 = vst [vmem:[%s396 + $0x138] sm:$0xff] %v475
                  %v477 = vld [vmem:[%s395 + $0x240] sm:$0xff]
                  %478 = vst [vmem:[%s396 + $0x140] sm:$0xff] %v477
                  %v479 = vld [vmem:[%s395 + $0x248] sm:$0xff]
                  %480 = vst [vmem:[%s396 + $0x148] sm:$0xff] %v479
                  %v481 = vld [vmem:[%s395 + $0x250] sm:$0xff]
                  %482 = vst [vmem:[%s396 + $0x150] sm:$0xff] %v481
                  %v483 = vld [vmem:[%s395 + $0x258] sm:$0xff]
                  %484 = vst [vmem:[%s396 + $0x158] sm:$0xff] %v483
                  %v485 = vld [vmem:[%s395 + $0x260] sm:$0xff]
                  %486 = vst [vmem:[%s396 + $0x160] sm:$0xff] %v485
                  %v487 = vld [vmem:[%s395 + $0x268] sm:$0xff]
                  %488 = vst [vmem:[%s396 + $0x168] sm:$0xff] %v487
                  %v489 = vld [vmem:[%s395 + $0x270] sm:$0xff]
                  %490 = vst [vmem:[%s396 + $0x170] sm:$0xff] %v489
                  %v491 = vld [vmem:[%s395 + $0x278] sm:$0xff]
                  %492 = vst [vmem:[%s396 + $0x178] sm:$0xff] %v491
                  %v493 = vld [vmem:[%s395 + $0x300] sm:$0xff]
                  %494 = vst [vmem:[%s396 + $0x180] sm:$0xff] %v493
                  %v495 = vld [vmem:[%s395 + $0x308] sm:$0xff]
                  %496 = vst [vmem:[%s396 + $0x188] sm:$0xff] %v495
                  %v497 = vld [vmem:[%s395 + $0x310] sm:$0xff]
                  %498 = vst [vmem:[%s396 + $0x190] sm:$0xff] %v497
                  %v499 = vld [vmem:[%s395 + $0x318] sm:$0xff]
                  %500 = vst [vmem:[%s396 + $0x198] sm:$0xff] %v499
                  %v501 = vld [vmem:[%s395 + $0x320] sm:$0xff]
                  %502 = vst [vmem:[%s396 + $0x1a0] sm:$0xff] %v501
                  %v503 = vld [vmem:[%s395 + $0x328] sm:$0xff]
                  %504 = vst [vmem:[%s396 + $0x1a8] sm:$0xff] %v503
                  %v505 = vld [vmem:[%s395 + $0x330] sm:$0xff]
                  %506 = vst [vmem:[%s396 + $0x1b0] sm:$0xff] %v505
                  %v507 = vld [vmem:[%s395 + $0x338] sm:$0xff]
                  %508 = vst [vmem:[%s396 + $0x1b8] sm:$0xff] %v507
                  %v509 = vld [vmem:[%s395 + $0x340] sm:$0xff]
                  %510 = vst [vmem:[%s396 + $0x1c0] sm:$0xff] %v509
                  %v511 = vld [vmem:[%s395 + $0x348] sm:$0xff]
                  %512 = vst [vmem:[%s396 + $0x1c8] sm:$0xff] %v511
                  %v513 = vld [vmem:[%s395 + $0x350] sm:$0xff]
                  %514 = vst [vmem:[%s396 + $0x1d0] sm:$0xff] %v513
                  %v515 = vld [vmem:[%s395 + $0x358] sm:$0xff]
                  %516 = vst [vmem:[%s396 + $0x1d8] sm:$0xff] %v515
                  %v517 = vld [vmem:[%s395 + $0x360] sm:$0xff]
                  %518 = vst [vmem:[%s396 + $0x1e0] sm:$0xff] %v517
                  %v519 = vld [vmem:[%s395 + $0x368] sm:$0xff]
                  %520 = vst [vmem:[%s396 + $0x1e8] sm:$0xff] %v519
                  %v521 = vld [vmem:[%s395 + $0x370] sm:$0xff]
                  %522 = vst [vmem:[%s396 + $0x1f0] sm:$0xff] %v521
                  %v523 = vld [vmem:[%s395 + $0x378] sm:$0xff]
                  %524 = vst [vmem:[%s396 + $0x1f8] sm:$0xff] %v523
                $region48: #{tpu_custom_call.1} parent=42 // loop_footer
                  %s394 = sadd.s32 1, %s390
                $region49: #{tpu_custom_call.1} parent=42 // loop_footer_branch
                  %389 = sbr.rel target = $region45
                $region50: #{tpu_custom_call.1} parent=42 // loop_exit
                  _
              $region43: #{tpu_custom_call.1} parent=27 // pred_fallthru
                _
              // Predicated region
              $region51: #{tpu_custom_call.1} parent=27 // pred_check
                _
              $region52: #{tpu_custom_call.1} parent=27 // pred_check_branch
                %526 = sbr.rel target = $region54
              $region53: #{tpu_custom_call.1} parent=27 // pred_region
                _
              $region54: #{tpu_custom_call.1} parent=27 // pred_fallthru
                _
            $region28: #{tpu_custom_call.1} parent=23 // pred_fallthru
              _
            // Predicated region
            $region29: #{tpu_custom_call.1} parent=23 // pred_check
              _
            $region30: #{tpu_custom_call.1} parent=23 // pred_check_branch
              %249 = sbr.rel target = $region32
            $region31: #{tpu_custom_call.1} parent=23 // pred_region
              loop: start=0, step=1, limit=1
              $region33: #{tpu_custom_call.1} parent=31 // loop_pre_header
                _
              $region34: #{tpu_custom_call.1} parent=31 // loop_header
                %s252 = sphi 0, %s256
                %p253 = scmp.ge.s32.totalorder %s252, 1
                %s257 = sphi %s243, %s243
                %s258 = sphi %s238, %s238
              $region35: #{tpu_custom_call.1} parent=31 // loop_header_branch
                %255 = sbr.rel (%p253) target = $region39
              $region36: #{tpu_custom_call.1} parent=31 // loop_body
                %v259 = vld [vmem:[%s257] sm:$0xff]
                %260 = vst [vmem:[%s258] sm:$0xff] %v259
                %v261 = vld [vmem:[%s257 + $0x8] sm:$0xff]
                %262 = vst [vmem:[%s258 + $0x8] sm:$0xff] %v261
                %v263 = vld [vmem:[%s257 + $0x10] sm:$0xff]
                %264 = vst [vmem:[%s258 + $0x10] sm:$0xff] %v263
                %v265 = vld [vmem:[%s257 + $0x18] sm:$0xff]
                %266 = vst [vmem:[%s258 + $0x18] sm:$0xff] %v265
                %v267 = vld [vmem:[%s257 + $0x20] sm:$0xff]
                %268 = vst [vmem:[%s258 + $0x20] sm:$0xff] %v267
                %v269 = vld [vmem:[%s257 + $0x28] sm:$0xff]
                %270 = vst [vmem:[%s258 + $0x28] sm:$0xff] %v269
                %v271 = vld [vmem:[%s257 + $0x30] sm:$0xff]
                %272 = vst [vmem:[%s258 + $0x30] sm:$0xff] %v271
                %v273 = vld [vmem:[%s257 + $0x38] sm:$0xff]
                %274 = vst [vmem:[%s258 + $0x38] sm:$0xff] %v273
                %v275 = vld [vmem:[%s257 + $0x40] sm:$0xff]
                %276 = vst [vmem:[%s258 + $0x40] sm:$0xff] %v275
                %v277 = vld [vmem:[%s257 + $0x48] sm:$0xff]
                %278 = vst [vmem:[%s258 + $0x48] sm:$0xff] %v277
                %v279 = vld [vmem:[%s257 + $0x50] sm:$0xff]
                %280 = vst [vmem:[%s258 + $0x50] sm:$0xff] %v279
                %v281 = vld [vmem:[%s257 + $0x58] sm:$0xff]
                %282 = vst [vmem:[%s258 + $0x58] sm:$0xff] %v281
                %v283 = vld [vmem:[%s257 + $0x60] sm:$0xff]
                %284 = vst [vmem:[%s258 + $0x60] sm:$0xff] %v283
                %v285 = vld [vmem:[%s257 + $0x68] sm:$0xff]
                %286 = vst [vmem:[%s258 + $0x68] sm:$0xff] %v285
                %v287 = vld [vmem:[%s257 + $0x70] sm:$0xff]
                %288 = vst [vmem:[%s258 + $0x70] sm:$0xff] %v287
                %v289 = vld [vmem:[%s257 + $0x78] sm:$0xff]
                %290 = vst [vmem:[%s258 + $0x78] sm:$0xff] %v289
                %v291 = vld [vmem:[%s257 + $0x100] sm:$0xff]
                %292 = vst [vmem:[%s258 + $0x80] sm:$0xff] %v291
                %v293 = vld [vmem:[%s257 + $0x108] sm:$0xff]
                %294 = vst [vmem:[%s258 + $0x88] sm:$0xff] %v293
                %v295 = vld [vmem:[%s257 + $0x110] sm:$0xff]
                %296 = vst [vmem:[%s258 + $0x90] sm:$0xff] %v295
                %v297 = vld [vmem:[%s257 + $0x118] sm:$0xff]
                %298 = vst [vmem:[%s258 + $0x98] sm:$0xff] %v297
                %v299 = vld [vmem:[%s257 + $0x120] sm:$0xff]
                %300 = vst [vmem:[%s258 + $0xa0] sm:$0xff] %v299
                %v301 = vld [vmem:[%s257 + $0x128] sm:$0xff]
                %302 = vst [vmem:[%s258 + $0xa8] sm:$0xff] %v301
                %v303 = vld [vmem:[%s257 + $0x130] sm:$0xff]
                %304 = vst [vmem:[%s258 + $0xb0] sm:$0xff] %v303
                %v305 = vld [vmem:[%s257 + $0x138] sm:$0xff]
                %306 = vst [vmem:[%s258 + $0xb8] sm:$0xff] %v305
                %v307 = vld [vmem:[%s257 + $0x140] sm:$0xff]
                %308 = vst [vmem:[%s258 + $0xc0] sm:$0xff] %v307
                %v309 = vld [vmem:[%s257 + $0x148] sm:$0xff]
                %310 = vst [vmem:[%s258 + $0xc8] sm:$0xff] %v309
                %v311 = vld [vmem:[%s257 + $0x150] sm:$0xff]
                %312 = vst [vmem:[%s258 + $0xd0] sm:$0xff] %v311
                %v313 = vld [vmem:[%s257 + $0x158] sm:$0xff]
                %314 = vst [vmem:[%s258 + $0xd8] sm:$0xff] %v313
                %v315 = vld [vmem:[%s257 + $0x160] sm:$0xff]
                %316 = vst [vmem:[%s258 + $0xe0] sm:$0xff] %v315
                %v317 = vld [vmem:[%s257 + $0x168] sm:$0xff]
                %318 = vst [vmem:[%s258 + $0xe8] sm:$0xff] %v317
                %v319 = vld [vmem:[%s257 + $0x170] sm:$0xff]
                %320 = vst [vmem:[%s258 + $0xf0] sm:$0xff] %v319
                %v321 = vld [vmem:[%s257 + $0x178] sm:$0xff]
                %322 = vst [vmem:[%s258 + $0xf8] sm:$0xff] %v321
                %v323 = vld [vmem:[%s257 + $0x200] sm:$0xff]
                %324 = vst [vmem:[%s258 + $0x100] sm:$0xff] %v323
                %v325 = vld [vmem:[%s257 + $0x208] sm:$0xff]
                %326 = vst [vmem:[%s258 + $0x108] sm:$0xff] %v325
                %v327 = vld [vmem:[%s257 + $0x210] sm:$0xff]
                %328 = vst [vmem:[%s258 + $0x110] sm:$0xff] %v327
                %v329 = vld [vmem:[%s257 + $0x218] sm:$0xff]
                %330 = vst [vmem:[%s258 + $0x118] sm:$0xff] %v329
                %v331 = vld [vmem:[%s257 + $0x220] sm:$0xff]
                %332 = vst [vmem:[%s258 + $0x120] sm:$0xff] %v331
                %v333 = vld [vmem:[%s257 + $0x228] sm:$0xff]
                %334 = vst [vmem:[%s258 + $0x128] sm:$0xff] %v333
                %v335 = vld [vmem:[%s257 + $0x230] sm:$0xff]
                %336 = vst [vmem:[%s258 + $0x130] sm:$0xff] %v335
                %v337 = vld [vmem:[%s257 + $0x238] sm:$0xff]
                %338 = vst [vmem:[%s258 + $0x138] sm:$0xff] %v337
                %v339 = vld [vmem:[%s257 + $0x240] sm:$0xff]
                %340 = vst [vmem:[%s258 + $0x140] sm:$0xff] %v339
                %v341 = vld [vmem:[%s257 + $0x248] sm:$0xff]
                %342 = vst [vmem:[%s258 + $0x148] sm:$0xff] %v341
                %v343 = vld [vmem:[%s257 + $0x250] sm:$0xff]
                %344 = vst [vmem:[%s258 + $0x150] sm:$0xff] %v343
                %v345 = vld [vmem:[%s257 + $0x258] sm:$0xff]
                %346 = vst [vmem:[%s258 + $0x158] sm:$0xff] %v345
                %v347 = vld [vmem:[%s257 + $0x260] sm:$0xff]
                %348 = vst [vmem:[%s258 + $0x160] sm:$0xff] %v347
                %v349 = vld [vmem:[%s257 + $0x268] sm:$0xff]
                %350 = vst [vmem:[%s258 + $0x168] sm:$0xff] %v349
                %v351 = vld [vmem:[%s257 + $0x270] sm:$0xff]
                %352 = vst [vmem:[%s258 + $0x170] sm:$0xff] %v351
                %v353 = vld [vmem:[%s257 + $0x278] sm:$0xff]
                %354 = vst [vmem:[%s258 + $0x178] sm:$0xff] %v353
                %v355 = vld [vmem:[%s257 + $0x300] sm:$0xff]
                %356 = vst [vmem:[%s258 + $0x180] sm:$0xff] %v355
                %v357 = vld [vmem:[%s257 + $0x308] sm:$0xff]
                %358 = vst [vmem:[%s258 + $0x188] sm:$0xff] %v357
                %v359 = vld [vmem:[%s257 + $0x310] sm:$0xff]
                %360 = vst [vmem:[%s258 + $0x190] sm:$0xff] %v359
                %v361 = vld [vmem:[%s257 + $0x318] sm:$0xff]
                %362 = vst [vmem:[%s258 + $0x198] sm:$0xff] %v361
                %v363 = vld [vmem:[%s257 + $0x320] sm:$0xff]
                %364 = vst [vmem:[%s258 + $0x1a0] sm:$0xff] %v363
                %v365 = vld [vmem:[%s257 + $0x328] sm:$0xff]
                %366 = vst [vmem:[%s258 + $0x1a8] sm:$0xff] %v365
                %v367 = vld [vmem:[%s257 + $0x330] sm:$0xff]
                %368 = vst [vmem:[%s258 + $0x1b0] sm:$0xff] %v367
                %v369 = vld [vmem:[%s257 + $0x338] sm:$0xff]
                %370 = vst [vmem:[%s258 + $0x1b8] sm:$0xff] %v369
                %v371 = vld [vmem:[%s257 + $0x340] sm:$0xff]
                %372 = vst [vmem:[%s258 + $0x1c0] sm:$0xff] %v371
                %v373 = vld [vmem:[%s257 + $0x348] sm:$0xff]
                %374 = vst [vmem:[%s258 + $0x1c8] sm:$0xff] %v373
                %v375 = vld [vmem:[%s257 + $0x350] sm:$0xff]
                %376 = vst [vmem:[%s258 + $0x1d0] sm:$0xff] %v375
                %v377 = vld [vmem:[%s257 + $0x358] sm:$0xff]
                %378 = vst [vmem:[%s258 + $0x1d8] sm:$0xff] %v377
                %v379 = vld [vmem:[%s257 + $0x360] sm:$0xff]
                %380 = vst [vmem:[%s258 + $0x1e0] sm:$0xff] %v379
                %v381 = vld [vmem:[%s257 + $0x368] sm:$0xff]
                %382 = vst [vmem:[%s258 + $0x1e8] sm:$0xff] %v381
                %v383 = vld [vmem:[%s257 + $0x370] sm:$0xff]
                %384 = vst [vmem:[%s258 + $0x1f0] sm:$0xff] %v383
                %v385 = vld [vmem:[%s257 + $0x378] sm:$0xff]
                %386 = vst [vmem:[%s258 + $0x1f8] sm:$0xff] %v385
              $region37: #{tpu_custom_call.1} parent=31 // loop_footer
                %s256 = sadd.s32 1, %s252
              $region38: #{tpu_custom_call.1} parent=31 // loop_footer_branch
                %251 = sbr.rel target = $region34
              $region39: #{tpu_custom_call.1} parent=31 // loop_exit
                _
            $region32: #{tpu_custom_call.1} parent=23 // pred_fallthru
              _
          $region24: #{tpu_custom_call.1} parent=19 // pred_fallthru
            _
          %527 = vnop
        $region20: #{tpu_custom_call.1} parent=15 // pred_fallthru
          _
        // Predicated region
        $region55: #{tpu_custom_call.1} parent=15 // pred_check
          %p528 = pneg %p73
        $region56: #{tpu_custom_call.1} parent=15 // pred_check_branch
          %530 = sbr.rel (%p528) target = $region58
        $region57: #{tpu_custom_call.1} parent=15 // pred_region
          %p531 = scmp.lt.s32.totalorder %s20, 2
          %s532 = scalar_select %p531, %s20, 2
          %s533 = smul.addr %s532, 2
          %s534 = smul.addr %s533, 8
          %s535 = scalar_lea.vmem %s1, %s534
        $region58: #{tpu_custom_call.1} parent=15 // pred_fallthru
          _
        // Predicated region
        $region59: #{tpu_custom_call.1} parent=15 // pred_check
          %p536 = pneg %p99
        $region60: #{tpu_custom_call.1} parent=15 // pred_check_branch
          %538 = sbr.rel (%p536) target = $region62
        $region61: #{tpu_custom_call.1} parent=15 // pred_region
          %p539 = scmp.lt.s32.totalorder %s20, 2
          %s540 = scalar_select %p539, %s20, 2
          %s541 = smul.addr %s540, 4
          %s542 = smul.addr %s541, 8
          %s543 = scalar_lea.vmem %s2, %s542
        $region62: #{tpu_custom_call.1} parent=15 // pred_fallthru
          _
        // Predicated region
        $region63: #{tpu_custom_call.1} parent=15 // pred_check
          %p544 = pneg %p125
        $region64: #{tpu_custom_call.1} parent=15 // pred_check_branch
          %546 = sbr.rel (%p544) target = $region66
        $region65: #{tpu_custom_call.1} parent=15 // pred_region
          %p547 = scmp.lt.s32.totalorder %s20, 2
          %s548 = scalar_select %p547, %s20, 2
          %s549 = scalar_lea.vmem %s3, %s548
        $region66: #{tpu_custom_call.1} parent=15 // pred_fallthru
          _
        // Predicated region
        $region67: #{tpu_custom_call.1} parent=15 // pred_check
          %p550 = pneg %p151
        $region68: #{tpu_custom_call.1} parent=15 // pred_check_branch
          %552 = sbr.rel (%p550) target = $region70
        $region69: #{tpu_custom_call.1} parent=15 // pred_region
          %p553 = scmp.lt.s32.totalorder %s20, 2
          %s554 = scalar_select %p553, %s20, 2
          %s555 = smul.addr %s554, 4
          %s556 = smul.addr %s555, 8
          %s557 = scalar_lea.vmem %s4, %s556
        $region70: #{tpu_custom_call.1} parent=15 // pred_fallthru
          _
      $region16: #{tpu_custom_call.1} parent=5 // pred_fallthru
        _
      %p558 = scmp.le.s32.totalorder 1, %s13
      %p559 = scmp.lt.s32.totalorder %s13, 7
      %p560 = pnand %p558, %p559
      %p561 = pneg %p560
      // Predicated region
      $region71: #{tpu_custom_call.1} parent=5 // pred_check
        _
      $region72: #{tpu_custom_call.1} parent=5 // pred_check_branch
        %563 = sbr.rel (%p560) target = $region74
      $region73: #{tpu_custom_call.1} parent=5 // pred_region
        %s564 = ssub.s32 %s13, 1
        %s565 = sand.u32 %s40, 1
        %s566 = sand.u32 %s40, 1
        %s567 = smul.addr %s566, 512
        %s568 = scalar_lea.vmem [#allocation2], %s567
        // Predicated region
        $region75: #{tpu_custom_call.1} parent=73 // pred_check
          %p569 = pneg %p53
        $region76: #{tpu_custom_call.1} parent=73 // pred_check_branch
          %571 = sbr.rel (%p569) target = $region78
        $region77: #{tpu_custom_call.1} parent=73 // pred_region
          _
        $region78: #{tpu_custom_call.1} parent=73 // pred_fallthru
          _
        %s572 = sand.u32 %s40, 1
        %s573 = sand.u32 %s40, 1
        %s574 = smul.addr %s573, 512
        %s575 = scalar_lea.vmem [#allocation2], %s574
        %p576 = pneg %p53
        %p577 = pneg %p50
        %p578 = scmp.lt.s32.totalorder %s22, 2
        %s579 = scalar_select %p578, %s22, 2
        %s580 = smul.addr %s579, 2
        %s581 = smul.addr %s580, 8
        %s582 = scalar_lea.vmem %s1, %s581
        %p583 = pneg %p79
        %p584 = pneg %p76
        %p585 = scmp.lt.s32.totalorder %s22, 2
        %s586 = scalar_select %p585, %s22, 2
        %s587 = smul.addr %s586, 4
        %s588 = smul.addr %s587, 8
        %s589 = scalar_lea.vmem %s2, %s588
        %p590 = pneg %p105
        %p591 = pneg %p102
        %p592 = scmp.lt.s32.totalorder %s22, 2
        %s593 = scalar_select %p592, %s22, 2
        %s594 = scalar_lea.vmem %s3, %s593
        %p595 = pneg %p131
        %p596 = pneg %p128
        %p597 = scmp.lt.s32.totalorder %s22, 2
        %s598 = scalar_select %p597, %s22, 2
        %s599 = smul.addr %s598, 4
        %s600 = smul.addr %s599, 8
        %s601 = scalar_lea.vmem %s4, %s600
        %p602 = pneg %p157
        %p603 = pneg %p154
        %p604 = pneg %p185
        %p605 = pneg %p182
        %s606 = smul.u32 16, %s23
        %p607 = scmp.lt.s32.totalorder %s22, 2
        %s608 = scalar_select %p607, %s22, 2
        %p609 = scmp.lt.s32.totalorder %s606, 31
        %s610 = scalar_select %p609, %s606, 31
        %s611 = smul.addr %s608, 32
        %s612 = sadd.s32 %s610, %s611
        %s613 = smul.addr %s612, 8
        %s614 = scalar_lea.vmem %s5, %s613
        %p615 = pneg %p213
        %p616 = pneg %p210
        %s617 = smul.u32 16, %s23
        %p618 = scmp.lt.s32.totalorder %s22, 2
        %s619 = scalar_select %p618, %s22, 2
        %p620 = scmp.lt.s32.totalorder %s617, 31
        %s621 = scalar_select %p620, %s617, 31
        %s622 = smul.addr %s619, 32
        %s623 = sadd.s32 %s621, %s622
        %s624 = smul.addr %s623, 8
        %s625 = scalar_lea.vmem %s6, %s624
        %s626 = smul.u32 16, %s23
        %p627 = scmp.lt.s32.totalorder %s22, 2
        %s628 = scalar_select %p627, %s22, 2
        %s629 = smul.addr %s628, 2
        %s630 = smul.addr %s629, 8
        %s631 = scalar_lea.vmem %s1, %s630
        %p632 = scmp.lt.s32.totalorder %s22, 2
        %s633 = scalar_select %p632, %s22, 2
        %s634 = smul.addr %s633, 4
        %s635 = smul.addr %s634, 8
        %s636 = scalar_lea.vmem %s2, %s635
        %p637 = scmp.lt.s32.totalorder %s22, 2
        %s638 = scalar_select %p637, %s22, 2
        %s639 = scalar_lea.vmem %s3, %s638
        %p640 = scmp.lt.s32.totalorder %s22, 2
        %s641 = scalar_select %p640, %s22, 2
        %s642 = smul.addr %s641, 4
        %s643 = smul.addr %s642, 8
        %s644 = scalar_lea.vmem %s4, %s643
        %s645 = smul.u32 16, %s23
        %p646 = scmp.lt.s32.totalorder %s22, 2
        %s647 = scalar_select %p646, %s22, 2
        %p648 = scmp.lt.s32.totalorder %s645, 31
        %s649 = scalar_select %p648, %s645, 31
        %s650 = smul.addr %s647, 32
        %s651 = sadd.s32 %s649, %s650
        %s652 = smul.addr %s651, 8
        %s653 = scalar_lea.vmem %s5, %s652
        %s654 = smul.u32 16, %s23
        %s655 = smul.u32 16, %s23
        %p656 = scmp.lt.s32.totalorder %s22, 2
        %s657 = scalar_select %p656, %s22, 2
        %p658 = scmp.lt.s32.totalorder %s655, 31
        %s659 = scalar_select %p658, %s655, 31
        %s660 = smul.addr %s657, 32
        %s661 = sadd.s32 %s659, %s660
        %s662 = smul.addr %s661, 8
        %s663 = scalar_lea.vmem %s6, %s662
        %s664 = smul.u32 16, %s23
        %v665 = vld [vmem:[%s568] sm:$0xff]
        %v666 = vld [vmem:[%s568 + $0x8] sm:$0xff]
        %v667 = vld [vmem:[%s568 + $0x10] sm:$0xff]
        %v668 = vld [vmem:[%s568 + $0x18] sm:$0xff]
        %v669 = vld [vmem:[%s568 + $0x20] sm:$0xff]
        %v670 = vld [vmem:[%s568 + $0x28] sm:$0xff]
        %v671 = vld [vmem:[%s568 + $0x30] sm:$0xff]
        %v672 = vld [vmem:[%s568 + $0x38] sm:$0xff]
        %v673 = vld [vmem:[%s568 + $0x40] sm:$0xff]
        %v674 = vld [vmem:[%s568 + $0x48] sm:$0xff]
        %v675 = vld [vmem:[%s568 + $0x50] sm:$0xff]
        %v676 = vld [vmem:[%s568 + $0x58] sm:$0xff]
        %v677 = vld [vmem:[%s568 + $0x60] sm:$0xff]
        %v678 = vld [vmem:[%s568 + $0x68] sm:$0xff]
        %v679 = vld [vmem:[%s568 + $0x70] sm:$0xff]
        %v680 = vld [vmem:[%s568 + $0x78] sm:$0xff]
        %v681 = vld [vmem:[%s568 + $0x80] sm:$0xff]
        %v682 = vld [vmem:[%s568 + $0x88] sm:$0xff]
        %v683 = vld [vmem:[%s568 + $0x90] sm:$0xff]
        %v684 = vld [vmem:[%s568 + $0x98] sm:$0xff]
        %v685 = vld [vmem:[%s568 + $0xa0] sm:$0xff]
        %v686 = vld [vmem:[%s568 + $0xa8] sm:$0xff]
        %v687 = vld [vmem:[%s568 + $0xb0] sm:$0xff]
        %v688 = vld [vmem:[%s568 + $0xb8] sm:$0xff]
        %v689 = vld [vmem:[%s568 + $0xc0] sm:$0xff]
        %v690 = vld [vmem:[%s568 + $0xc8] sm:$0xff]
        %v691 = vld [vmem:[%s568 + $0xd0] sm:$0xff]
        %v692 = vld [vmem:[%s568 + $0xd8] sm:$0xff]
        %v693 = vld [vmem:[%s568 + $0xe0] sm:$0xff]
        %v694 = vld [vmem:[%s568 + $0xe8] sm:$0xff]
        %v695 = vld [vmem:[%s568 + $0xf0] sm:$0xff]
        %v696 = vld [vmem:[%s568 + $0xf8] sm:$0xff]
        %v697 = vld [vmem:[%s568 + $0x100] sm:$0xff]
        %v698 = vld [vmem:[%s568 + $0x108] sm:$0xff]
        %v699 = vld [vmem:[%s568 + $0x110] sm:$0xff]
        %v700 = vld [vmem:[%s568 + $0x118] sm:$0xff]
        %v701 = vld [vmem:[%s568 + $0x120] sm:$0xff]
        %v702 = vld [vmem:[%s568 + $0x128] sm:$0xff]
        %v703 = vld [vmem:[%s568 + $0x130] sm:$0xff]
        %v704 = vld [vmem:[%s568 + $0x138] sm:$0xff]
        %v705 = vld [vmem:[%s568 + $0x140] sm:$0xff]
        %v706 = vld [vmem:[%s568 + $0x148] sm:$0xff]
        %v707 = vld [vmem:[%s568 + $0x150] sm:$0xff]
        %v708 = vld [vmem:[%s568 + $0x158] sm:$0xff]
        %v709 = vld [vmem:[%s568 + $0x160] sm:$0xff]
        %v710 = vld [vmem:[%s568 + $0x168] sm:$0xff]
        %v711 = vld [vmem:[%s568 + $0x170] sm:$0xff]
        %v712 = vld [vmem:[%s568 + $0x178] sm:$0xff]
        %v713 = vld [vmem:[%s568 + $0x180] sm:$0xff]
        %v714 = vld [vmem:[%s568 + $0x188] sm:$0xff]
        %v715 = vld [vmem:[%s568 + $0x190] sm:$0xff]
        %v716 = vld [vmem:[%s568 + $0x198] sm:$0xff]
        %v717 = vld [vmem:[%s568 + $0x1a0] sm:$0xff]
        %v718 = vld [vmem:[%s568 + $0x1a8] sm:$0xff]
        %v719 = vld [vmem:[%s568 + $0x1b0] sm:$0xff]
        %v720 = vld [vmem:[%s568 + $0x1b8] sm:$0xff]
        %v721 = vld [vmem:[%s568 + $0x1c0] sm:$0xff]
        %v722 = vld [vmem:[%s568 + $0x1c8] sm:$0xff]
        %v723 = vld [vmem:[%s568 + $0x1d0] sm:$0xff]
        %v724 = vld [vmem:[%s568 + $0x1d8] sm:$0xff]
        %v725 = vld [vmem:[%s568 + $0x1e0] sm:$0xff]
        %v726 = vld [vmem:[%s568 + $0x1e8] sm:$0xff]
        %v727 = vld [vmem:[%s568 + $0x1f0] sm:$0xff]
        %v728 = vld [vmem:[%s568 + $0x1f8] sm:$0xff]
        %v729 = vld [vmem:[%s631] sm:$0xff]
        %v730 = vld [vmem:[%s631 + $0x8] sm:$0xff]
        %v731 = vld [vmem:[%s639] sm:$0x1]
        %v733 = vlaneseq
        %v734 = vshrl.u32 %v733, 7
        %v735 = vsub.s32 0, %v734
        %v736 = vrot.slane %v731, %v735
        %vm738 = vcmask 130048
        %v740 = vsel %vm738, %v665, 0
        %v743 = vsel %vm738, %v666, 0
        %v746 = vsel %vm738, %v667, 0
        %v749 = vsel %vm738, %v668, 0
        %v752 = vsel %vm738, %v669, 0
        %v755 = vsel %vm738, %v670, 0
        %v758 = vsel %vm738, %v671, 0
        %v761 = vsel %vm738, %v672, 0
        %v764 = vsel %vm738, %v673, 0
        %v767 = vsel %vm738, %v674, 0
        %v770 = vsel %vm738, %v675, 0
        %v773 = vsel %vm738, %v676, 0
        %v776 = vsel %vm738, %v677, 0
        %v779 = vsel %vm738, %v678, 0
        %v782 = vsel %vm738, %v679, 0
        %v785 = vsel %vm738, %v680, 0
        %v788 = vsel %vm738, %v681, 0
        %v791 = vsel %vm738, %v682, 0
        %v794 = vsel %vm738, %v683, 0
        %v797 = vsel %vm738, %v684, 0
        %v800 = vsel %vm738, %v685, 0
        %v803 = vsel %vm738, %v686, 0
        %v806 = vsel %vm738, %v687, 0
        %v809 = vsel %vm738, %v688, 0
        %v812 = vsel %vm738, %v689, 0
        %v815 = vsel %vm738, %v690, 0
        %v818 = vsel %vm738, %v691, 0
        %v821 = vsel %vm738, %v692, 0
        %v824 = vsel %vm738, %v693, 0
        %v827 = vsel %vm738, %v694, 0
        %v830 = vsel %vm738, %v695, 0
        %v833 = vsel %vm738, %v696, 0
        %v836 = vsel %vm738, %v697, 0
        %v839 = vsel %vm738, %v698, 0
        %v842 = vsel %vm738, %v699, 0
        %v845 = vsel %vm738, %v700, 0
        %v848 = vsel %vm738, %v701, 0
        %v851 = vsel %vm738, %v702, 0
        %v854 = vsel %vm738, %v703, 0
        %v857 = vsel %vm738, %v704, 0
        %v860 = vsel %vm738, %v705, 0
        %v863 = vsel %vm738, %v706, 0
        %v866 = vsel %vm738, %v707, 0
        %v869 = vsel %vm738, %v708, 0
        %v872 = vsel %vm738, %v709, 0
        %v875 = vsel %vm738, %v710, 0
        %v878 = vsel %vm738, %v711, 0
        %v881 = vsel %vm738, %v712, 0
        %v884 = vsel %vm738, %v713, 0
        %v887 = vsel %vm738, %v714, 0
        %v890 = vsel %vm738, %v715, 0
        %v893 = vsel %vm738, %v716, 0
        %v896 = vsel %vm738, %v717, 0
        %v899 = vsel %vm738, %v718, 0
        %v902 = vsel %vm738, %v719, 0
        %v905 = vsel %vm738, %v720, 0
        %v908 = vsel %vm738, %v721, 0
        %v911 = vsel %vm738, %v722, 0
        %v914 = vsel %vm738, %v723, 0
        %v917 = vsel %vm738, %v724, 0
        %v920 = vsel %vm738, %v725, 0
        %v923 = vsel %vm738, %v726, 0
        %v926 = vsel %vm738, %v727, 0
        %v929 = vsel %vm738, %v728, 0
        %931 = vmatprep.subr.mxu0 0.0
        %932 = vmatpush1.msra.mxu0 %v729
        %933 = vmatprep.subr.mxu0 0.0
        %934 = vmatpush1.msra.mxu0 %v730
        %935 = vmatprep.subr.mxu0 0.0
        %936 = vmatpush1.msra.mxu0 0.0
        %937 = vmatprep.subr.mxu0 0.0
        %938 = vmatpush1.msra.mxu0 0.0
        %939 = vmatprep.subr.mxu0 0.0
        %940 = vmatpush1.msra.mxu0 0.0
        %941 = vmatprep.subr.mxu0 0.0
        %942 = vmatpush1.msra.mxu0 0.0
        %943 = vmatprep.subr.mxu0 0.0
        %944 = vmatpush1.msra.mxu0 0.0
        %945 = vmatprep.subr.mxu0 0.0
        %946 = vmatpush1.msra.mxu0 0.0
        %947 = vmatprep.subr.mxu0 0.0
        %948 = vmatpush1.msra.mxu0 0.0
        %949 = vmatprep.subr.mxu0 0.0
        %950 = vmatpush1.msra.mxu0 0.0
        %951 = vmatprep.subr.mxu0 0.0
        %952 = vmatpush1.msra.mxu0 0.0
        %953 = vmatprep.subr.mxu0 0.0
        %954 = vmatpush1.msra.mxu0 0.0
        %955 = vmatprep.subr.mxu0 0.0
        %956 = vmatpush1.msra.mxu0 0.0
        %957 = vmatprep.subr.mxu0 0.0
        %958 = vmatpush1.msra.mxu0 0.0
        %959 = vmatprep.subr.mxu0 0.0
        %960 = vmatpush1.msra.mxu0 0.0
        %961 = vmatprep.subr.mxu0 0.0
        %962 = vmatpush1.msra.mxu0 0.0
        %963 = vmatprep.subr.mxu0 0.0
        %964 = vmatpush1.msra.mxu0 0.0
        %965 = vmatprep.subr.mxu0 0.0
        %966 = vmatpush1.msra.mxu0 0.0
        %967 = vmatprep.subr.mxu0 0.0
        %968 = vmatpush1.msra.mxu0 0.0
        %969 = vmatprep.subr.mxu0 0.0
        %970 = vmatpush1.msra.mxu0 0.0
        %971 = vmatprep.subr.mxu0 0.0
        %972 = vmatpush1.msra.mxu0 0.0
        %973 = vmatprep.subr.mxu0 0.0
        %974 = vmatpush1.msra.mxu0 0.0
        %975 = vmatprep.subr.mxu0 0.0
        %976 = vmatpush1.msra.mxu0 0.0
        %977 = vmatprep.subr.mxu0 0.0
        %978 = vmatpush1.msra.mxu0 0.0
        %979 = vmatprep.subr.mxu0 0.0
        %980 = vmatpush1.msra.mxu0 0.0
        %981 = vmatprep.subr.mxu0 0.0
        %982 = vmatpush1.msra.mxu0 0.0
        %983 = vmatprep.subr.mxu0 0.0
        %984 = vmatpush1.msra.mxu0 0.0
        %985 = vmatprep.subr.mxu0 0.0
        %986 = vmatpush1.msra.mxu0 0.0
        %987 = vmatprep.subr.mxu0 0.0
        %988 = vmatpush1.msra.mxu0 0.0
        %989 = vmatprep.subr.mxu0 0.0
        %990 = vmatpush1.msra.mxu0 0.0
        %991 = vmatprep.subr.mxu0 0.0
        %992 = vmatpush1.msra.mxu0 0.0
        %993 = vmatprep.subr.mxu0 0.0
        %994 = vmatpush1.msra.mxu0 0.0
        %995 = vmatprep.mubr.f32.mxu0 0.0
        %996 = vmatmul.mubr.f32.gmra.mrb[0].mxu0 %v740
        %v997 = vpop.f32.mrb[0].mxu0
        %v998 = vadd.f32 %v736, %v997
        %v999 = vpop.f32.mrb[0].mxu0
        %1000 = vmatprep.mubr.f32.mxu0 0.0
        %1001 = vmatmul.mubr.f32.gmra.mrb[0].mxu0 %v743
        %v1002 = vpop.f32.mrb[0].mxu0
        %v1003 = vadd.f32 %v736, %v1002
        %v1004 = vpop.f32.mrb[0].mxu0
        %1005 = vmatprep.mubr.f32.mxu0 0.0
        %1006 = vmatmul.mubr.f32.gmra.mrb[0].mxu0 %v746
        %v1007 = vpop.f32.mrb[0].mxu0
        %v1008 = vadd.f32 %v736, %v1007
        %v1009 = vpop.f32.mrb[0].mxu0
        %1010 = vmatprep.mubr.f32.mxu0 0.0
        %1011 = vmatmul.mubr.f32.gmra.mrb[0].mxu0 %v749
        %v1012 = vpop.f32.mrb[0].mxu0
        %v1013 = vadd.f32 %v736, %v1012
        %v1014 = vpop.f32.mrb[0].mxu0
        %1015 = vmatprep.mubr.f32.mxu0 0.0
        %1016 = vmatmul.mubr.f32.gmra.mrb[0].mxu0 %v752
        %v1017 = vpop.f32.mrb[0].mxu0
        %v1018 = vadd.f32 %v736, %v1017
        %v1019 = vpop.f32.mrb[0].mxu0
        %1020 = vmatprep.mubr.f32.mxu0 0.0
        %1021 = vmatmul.mubr.f32.gmra.mrb[0].mxu0 %v755
        %v1022 = vpop.f32.mrb[0].mxu0
        %v1023 = vadd.f32 %v736, %v1022
        %v1024 = vpop.f32.mrb[0].mxu0
        %1025 = vmatprep.mubr.f32.mxu0 0.0
        %1026 = vmatmul.mubr.f32.gmra.mrb[0].mxu0 %v758
        %v1027 = vpop.f32.mrb[0].mxu0
        %v1028 = vadd.f32 %v736, %v1027
        %v1029 = vpop.f32.mrb[0].mxu0
        %1030 = vmatprep.mubr.f32.mxu0 0.0
        %1031 = vmatmul.mubr.f32.gmra.mrb[0].mxu0 %v761
        %v1032 = vpop.f32.mrb[0].mxu0
        %v1033 = vadd.f32 %v736, %v1032
        %v1034 = vpop.f32.mrb[0].mxu0
        %1035 = vmatprep.mubr.f32.mxu0 0.0
        %1036 = vmatmul.mubr.f32.gmra.mrb[0].mxu0 %v764
        %v1037 = vpop.f32.mrb[0].mxu0
        %v1038 = vadd.f32 %v736, %v1037
        %v1039 = vpop.f32.mrb[0].mxu0
        %1040 = vmatprep.mubr.f32.mxu0 0.0
        %1041 = vmatmul.mubr.f32.gmra.mrb[0].mxu0 %v767
        %v1042 = vpop.f32.mrb[0].mxu0
        %v1043 = vadd.f32 %v736, %v1042
        %v1044 = vpop.f32.mrb[0].mxu0
        %1045 = vmatprep.mubr.f32.mxu0 0.0
        %1046 = vmatmul.mubr.f32.gmra.mrb[0].mxu0 %v770
        %v1047 = vpop.f32.mrb[0].mxu0
        %v1048 = vadd.f32 %v736, %v1047
        %v1049 = vpop.f32.mrb[0].mxu0
        %1050 = vmatprep.mubr.f32.mxu0 0.0
        %1051 = vmatmul.mubr.f32.gmra.mrb[0].mxu0 %v773
        %v1052 = vpop.f32.mrb[0].mxu0
        %v1053 = vadd.f32 %v736, %v1052
        %v1054 = vpop.f32.mrb[0].mxu0
        %1055 = vmatprep.mubr.f32.mxu0 0.0
        %1056 = vmatmul.mubr.f32.gmra.mrb[0].mxu0 %v776
        %v1057 = vpop.f32.mrb[0].mxu0
        %v1058 = vadd.f32 %v736, %v1057
        %v1059 = vpop.f32.mrb[0].mxu0
        %1060 = vmatprep.mubr.f32.mxu0 0.0
        %1061 = vmatmul.mubr.f32.gmra.mrb[0].mxu0 %v779
        %v1062 = vpop.f32.mrb[0].mxu0
        %v1063 = vadd.f32 %v736, %v1062
        %v1064 = vpop.f32.mrb[0].mxu0
        %1065 = vmatprep.mubr.f32.mxu0 0.0
        %1066 = vmatmul.mubr.f32.gmra.mrb[0].mxu0 %v782
        %v1067 = vpop.f32.mrb[0].mxu0
        %v1068 = vadd.f32 %v736, %v1067
        %v1069 = vpop.f32.mrb[0].mxu0
        %1070 = vmatprep.mubr.f32.mxu0 0.0
        %1071 = vmatmul.mubr.f32.gmra.mrb[0].mxu0 %v785
        %v1072 = vpop.f32.mrb[0].mxu0
        %v1073 = vadd.f32 %v736, %v1072
        %v1074 = vpop.f32.mrb[0].mxu0
        %1075 = vmatprep.mubr.f32.mxu0 0.0
        %1076 = vmatmul.mubr.f32.gmra.mrb[0].mxu0 %v788
        %v1077 = vpop.f32.mrb[0].mxu0
        %v1078 = vadd.f32 %v736, %v1077
        %v1079 = vpop.f32.mrb[0].mxu0
        %1080 = vmatprep.mubr.f32.mxu0 0.0
        %1081 = vmatmul.mubr.f32.gmra.mrb[0].mxu0 %v791
        %v1082 = vpop.f32.mrb[0].mxu0
        %v1083 = vadd.f32 %v736, %v1082
        %v1084 = vpop.f32.mrb[0].mxu0
        %1085 = vmatprep.mubr.f32.mxu0 0.0
        %1086 = vmatmul.mubr.f32.gmra.mrb[0].mxu0 %v794
        %v1087 = vpop.f32.mrb[0].mxu0
        %v1088 = vadd.f32 %v736, %v1087
        %v1089 = vpop.f32.mrb[0].mxu0
        %1090 = vmatprep.mubr.f32.mxu0 0.0
        %1091 = vmatmul.mubr.f32.gmra.mrb[0].mxu0 %v797
        %v1092 = vpop.f32.mrb[0].mxu0
        %v1093 = vadd.f32 %v736, %v1092
        %v1094 = vpop.f32.mrb[0].mxu0
        %1095 = vmatprep.mubr.f32.mxu0 0.0
        %1096 = vmatmul.mubr.f32.gmra.mrb[0].mxu0 %v800
        %v1097 = vpop.f32.mrb[0].mxu0
        %v1098 = vadd.f32 %v736, %v1097
        %v1099 = vpop.f32.mrb[0].mxu0
        %1100 = vmatprep.mubr.f32.mxu0 0.0
        %1101 = vmatmul.mubr.f32.gmra.mrb[0].mxu0 %v803
        %v1102 = vpop.f32.mrb[0].mxu0
        %v1103 = vadd.f32 %v736, %v1102
        %v1104 = vpop.f32.mrb[0].mxu0
        %1105 = vmatprep.mubr.f32.mxu0 0.0
        %1106 = vmatmul.mubr.f32.gmra.mrb[0].mxu0 %v806
        %v1107 = vpop.f32.mrb[0].mxu0
        %v1108 = vadd.f32 %v736, %v1107
        %v1109 = vpop.f32.mrb[0].mxu0
        %1110 = vmatprep.mubr.f32.mxu0 0.0
        %1111 = vmatmul.mubr.f32.gmra.mrb[0].mxu0 %v809
        %v1112 = vpop.f32.mrb[0].mxu0
        %v1113 = vadd.f32 %v736, %v1112
        %v1114 = vpop.f32.mrb[0].mxu0
        %1115 = vmatprep.mubr.f32.mxu0 0.0
        %1116 = vmatmul.mubr.f32.gmra.mrb[0].mxu0 %v812
        %v1117 = vpop.f32.mrb[0].mxu0
        %v1118 = vadd.f32 %v736, %v1117
        %v1119 = vpop.f32.mrb[0].mxu0
        %1120 = vmatprep.mubr.f32.mxu0 0.0
        %1121 = vmatmul.mubr.f32.gmra.mrb[0].mxu0 %v815
        %v1122 = vpop.f32.mrb[0].mxu0
        %v1123 = vadd.f32 %v736, %v1122
        %v1124 = vpop.f32.mrb[0].mxu0
        %1125 = vmatprep.mubr.f32.mxu0 0.0
        %1126 = vmatmul.mubr.f32.gmra.mrb[0].mxu0 %v818
        %v1127 = vpop.f32.mrb[0].mxu0
        %v1128 = vadd.f32 %v736, %v1127
        %v1129 = vpop.f32.mrb[0].mxu0
        %1130 = vmatprep.mubr.f32.mxu0 0.0
        %1131 = vmatmul.mubr.f32.gmra.mrb[0].mxu0 %v821
        %v1132 = vpop.f32.mrb[0].mxu0
        %v1133 = vadd.f32 %v736, %v1132
        %v1134 = vpop.f32.mrb[0].mxu0
        %1135 = vmatprep.mubr.f32.mxu0 0.0
        %1136 = vmatmul.mubr.f32.gmra.mrb[0].mxu0 %v824
        %v1137 = vpop.f32.mrb[0].mxu0
        %v1138 = vadd.f32 %v736, %v1137
        %v1139 = vpop.f32.mrb[0].mxu0
        %1140 = vmatprep.mubr.f32.mxu0 0.0
        %1141 = vmatmul.mubr.f32.gmra.mrb[0].mxu0 %v827
        %v1142 = vpop.f32.mrb[0].mxu0
        %v1143 = vadd.f32 %v736, %v1142
        %v1144 = vpop.f32.mrb[0].mxu0
        %1145 = vmatprep.mubr.f32.mxu0 0.0
        %1146 = vmatmul.mubr.f32.gmra.mrb[0].mxu0 %v830
        %v1147 = vpop.f32.mrb[0].mxu0
        %v1148 = vadd.f32 %v736, %v1147
        %v1149 = vpop.f32.mrb[0].mxu0
        %1150 = vmatprep.mubr.f32.mxu0 0.0
        %1151 = vmatmul.mubr.f32.gmra.mrb[0].mxu0 %v833
        %v1152 = vpop.f32.mrb[0].mxu0
        %v1153 = vadd.f32 %v736, %v1152
        %v1154 = vpop.f32.mrb[0].mxu0
        %1155 = vmatprep.mubr.f32.mxu0 0.0
        %1156 = vmatmul.mubr.f32.gmra.mrb[0].mxu0 %v836
        %v1157 = vpop.f32.mrb[0].mxu0
        %v1158 = vadd.f32 %v736, %v1157
        %v1159 = vpop.f32.mrb[0].mxu0
        %1160 = vmatprep.mubr.f32.mxu0 0.0
        %1161 = vmatmul.mubr.f32.gmra.mrb[0].mxu0 %v839
        %v1162 = vpop.f32.mrb[0].mxu0
        %v1163 = vadd.f32 %v736, %v1162
        %v1164 = vpop.f32.mrb[0].mxu0
        %1165 = vmatprep.mubr.f32.mxu0 0.0
        %1166 = vmatmul.mubr.f32.gmra.mrb[0].mxu0 %v842
        %v1167 = vpop.f32.mrb[0].mxu0
        %v1168 = vadd.f32 %v736, %v1167
        %v1169 = vpop.f32.mrb[0].mxu0
        %1170 = vmatprep.mubr.f32.mxu0 0.0
        %1171 = vmatmul.mubr.f32.gmra.mrb[0].mxu0 %v845
        %v1172 = vpop.f32.mrb[0].mxu0
        %v1173 = vadd.f32 %v736, %v1172
        %v1174 = vpop.f32.mrb[0].mxu0
        %1175 = vmatprep.mubr.f32.mxu0 0.0
        %1176 = vmatmul.mubr.f32.gmra.mrb[0].mxu0 %v848
        %v1177 = vpop.f32.mrb[0].mxu0
        %v1178 = vadd.f32 %v736, %v1177
        %v1179 = vpop.f32.mrb[0].mxu0
        %1180 = vmatprep.mubr.f32.mxu0 0.0
        %1181 = vmatmul.mubr.f32.gmra.mrb[0].mxu0 %v851
        %v1182 = vpop.f32.mrb[0].mxu0
        %v1183 = vadd.f32 %v736, %v1182
        %v1184 = vpop.f32.mrb[0].mxu0
        %1185 = vmatprep.mubr.f32.mxu0 0.0
        %1186 = vmatmul.mubr.f32.gmra.mrb[0].mxu0 %v854
        %v1187 = vpop.f32.mrb[0].mxu0
        %v1188 = vadd.f32 %v736, %v1187
        %v1189 = vpop.f32.mrb[0].mxu0
        %1190 = vmatprep.mubr.f32.mxu0 0.0
        %1191 = vmatmul.mubr.f32.gmra.mrb[0].mxu0 %v857
        %v1192 = vpop.f32.mrb[0].mxu0
        %v1193 = vadd.f32 %v736, %v1192
        %v1194 = vpop.f32.mrb[0].mxu0
        %1195 = vmatprep.mubr.f32.mxu0 0.0
        %1196 = vmatmul.mubr.f32.gmra.mrb[0].mxu0 %v860
        %v1197 = vpop.f32.mrb[0].mxu0
        %v1198 = vadd.f32 %v736, %v1197
        %v1199 = vpop.f32.mrb[0].mxu0
        %1200 = vmatprep.mubr.f32.mxu0 0.0
        %1201 = vmatmul.mubr.f32.gmra.mrb[0].mxu0 %v863
        %v1202 = vpop.f32.mrb[0].mxu0
        %v1203 = vadd.f32 %v736, %v1202
        %v1204 = vpop.f32.mrb[0].mxu0
        %1205 = vmatprep.mubr.f32.mxu0 0.0
        %1206 = vmatmul.mubr.f32.gmra.mrb[0].mxu0 %v866
        %v1207 = vpop.f32.mrb[0].mxu0
        %v1208 = vadd.f32 %v736, %v1207
        %v1209 = vpop.f32.mrb[0].mxu0
        %1210 = vmatprep.mubr.f32.mxu0 0.0
        %1211 = vmatmul.mubr.f32.gmra.mrb[0].mxu0 %v869
        %v1212 = vpop.f32.mrb[0].mxu0
        %v1213 = vadd.f32 %v736, %v1212
        %v1214 = vpop.f32.mrb[0].mxu0
        %1215 = vmatprep.mubr.f32.mxu0 0.0
        %1216 = vmatmul.mubr.f32.gmra.mrb[0].mxu0 %v872
        %v1217 = vpop.f32.mrb[0].mxu0
        %v1218 = vadd.f32 %v736, %v1217
        %v1219 = vpop.f32.mrb[0].mxu0
        %1220 = vmatprep.mubr.f32.mxu0 0.0
        %1221 = vmatmul.mubr.f32.gmra.mrb[0].mxu0 %v875
        %v1222 = vpop.f32.mrb[0].mxu0
        %v1223 = vadd.f32 %v736, %v1222
        %v1224 = vpop.f32.mrb[0].mxu0
        %1225 = vmatprep.mubr.f32.mxu0 0.0
        %1226 = vmatmul.mubr.f32.gmra.mrb[0].mxu0 %v878
        %v1227 = vpop.f32.mrb[0].mxu0
        %v1228 = vadd.f32 %v736, %v1227
        %v1229 = vpop.f32.mrb[0].mxu0
        %1230 = vmatprep.mubr.f32.mxu0 0.0
        %1231 = vmatmul.mubr.f32.gmra.mrb[0].mxu0 %v881
        %v1232 = vpop.f32.mrb[0].mxu0
        %v1233 = vadd.f32 %v736, %v1232
        %v1234 = vpop.f32.mrb[0].mxu0
        %1235 = vmatprep.mubr.f32.mxu0 0.0
        %1236 = vmatmul.mubr.f32.gmra.mrb[0].mxu0 %v884
        %v1237 = vpop.f32.mrb[0].mxu0
        %v1238 = vadd.f32 %v736, %v1237
        %v1239 = vpop.f32.mrb[0].mxu0
        %1240 = vmatprep.mubr.f32.mxu0 0.0
        %1241 = vmatmul.mubr.f32.gmra.mrb[0].mxu0 %v887
        %v1242 = vpop.f32.mrb[0].mxu0
        %v1243 = vadd.f32 %v736, %v1242
        %v1244 = vpop.f32.mrb[0].mxu0
        %1245 = vmatprep.mubr.f32.mxu0 0.0
        %1246 = vmatmul.mubr.f32.gmra.mrb[0].mxu0 %v890
        %v1247 = vpop.f32.mrb[0].mxu0
        %v1248 = vadd.f32 %v736, %v1247
        %v1249 = vpop.f32.mrb[0].mxu0
        %1250 = vmatprep.mubr.f32.mxu0 0.0
        %1251 = vmatmul.mubr.f32.gmra.mrb[0].mxu0 %v893
        %v1252 = vpop.f32.mrb[0].mxu0
        %v1253 = vadd.f32 %v736, %v1252
        %v1254 = vpop.f32.mrb[0].mxu0
        %1255 = vmatprep.mubr.f32.mxu0 0.0
        %1256 = vmatmul.mubr.f32.gmra.mrb[0].mxu0 %v896
        %v1257 = vpop.f32.mrb[0].mxu0
        %v1258 = vadd.f32 %v736, %v1257
        %v1259 = vpop.f32.mrb[0].mxu0
        %1260 = vmatprep.mubr.f32.mxu0 0.0
        %1261 = vmatmul.mubr.f32.gmra.mrb[0].mxu0 %v899
        %v1262 = vpop.f32.mrb[0].mxu0
        %v1263 = vadd.f32 %v736, %v1262
        %v1264 = vpop.f32.mrb[0].mxu0
        %1265 = vmatprep.mubr.f32.mxu0 0.0
        %1266 = vmatmul.mubr.f32.gmra.mrb[0].mxu0 %v902
        %v1267 = vpop.f32.mrb[0].mxu0
        %v1268 = vadd.f32 %v736, %v1267
        %v1269 = vpop.f32.mrb[0].mxu0
        %1270 = vmatprep.mubr.f32.mxu0 0.0
        %1271 = vmatmul.mubr.f32.gmra.mrb[0].mxu0 %v905
        %v1272 = vpop.f32.mrb[0].mxu0
        %v1273 = vadd.f32 %v736, %v1272
        %v1274 = vpop.f32.mrb[0].mxu0
        %1275 = vmatprep.mubr.f32.mxu0 0.0
        %1276 = vmatmul.mubr.f32.gmra.mrb[0].mxu0 %v908
        %v1277 = vpop.f32.mrb[0].mxu0
        %v1278 = vadd.f32 %v736, %v1277
        %v1279 = vpop.f32.mrb[0].mxu0
        %1280 = vmatprep.mubr.f32.mxu0 0.0
        %1281 = vmatmul.mubr.f32.gmra.mrb[0].mxu0 %v911
        %v1282 = vpop.f32.mrb[0].mxu0
        %v1283 = vadd.f32 %v736, %v1282
        %v1284 = vpop.f32.mrb[0].mxu0
        %1285 = vmatprep.mubr.f32.mxu0 0.0
        %1286 = vmatmul.mubr.f32.gmra.mrb[0].mxu0 %v914
        %v1287 = vpop.f32.mrb[0].mxu0
        %v1288 = vadd.f32 %v736, %v1287
        %v1289 = vpop.f32.mrb[0].mxu0
        %1290 = vmatprep.mubr.f32.mxu0 0.0
        %1291 = vmatmul.mubr.f32.gmra.mrb[0].mxu0 %v917
        %v1292 = vpop.f32.mrb[0].mxu0
        %v1293 = vadd.f32 %v736, %v1292
        %v1294 = vpop.f32.mrb[0].mxu0
        %1295 = vmatprep.mubr.f32.mxu0 0.0
        %1296 = vmatmul.mubr.f32.gmra.mrb[0].mxu0 %v920
        %v1297 = vpop.f32.mrb[0].mxu0
        %v1298 = vadd.f32 %v736, %v1297
        %v1299 = vpop.f32.mrb[0].mxu0
        %1300 = vmatprep.mubr.f32.mxu0 0.0
        %1301 = vmatmul.mubr.f32.gmra.mrb[0].mxu0 %v923
        %v1302 = vpop.f32.mrb[0].mxu0
        %v1303 = vadd.f32 %v736, %v1302
        %v1304 = vpop.f32.mrb[0].mxu0
        %1305 = vmatprep.mubr.f32.mxu0 0.0
        %1306 = vmatmul.mubr.f32.gmra.mrb[0].mxu0 %v926
        %v1307 = vpop.f32.mrb[0].mxu0
        %v1308 = vadd.f32 %v736, %v1307
        %v1309 = vpop.f32.mrb[0].mxu0
        %1310 = vmatprep.mubr.f32.mxu0 0.0
        %1311 = vmatmul.mubr.f32.gmra.mrb[0].mxu0 %v929
        %v1312 = vpop.f32.mrb[0].mxu0
        %v1313 = vadd.f32 %v736, %v1312
        %v1314 = vpop.f32.mrb[0].mxu0
        %1315 = vdwg.mxu0
        %v1316 = vtanh.pop %v998
        %v1317 = vtanh.pop %v1003
        %v1318 = vtanh.pop %v1008
        %v1319 = vtanh.pop %v1013
        %v1320 = vtanh.pop %v1018
        %v1321 = vtanh.pop %v1023
        %v1322 = vtanh.pop %v1028
        %v1323 = vtanh.pop %v1033
        %v1324 = vtanh.pop %v1038
        %v1325 = vtanh.pop %v1043
        %v1326 = vtanh.pop %v1048
        %v1327 = vtanh.pop %v1053
        %v1328 = vtanh.pop %v1058
        %v1329 = vtanh.pop %v1063
        %v1330 = vtanh.pop %v1068
        %v1331 = vtanh.pop %v1073
        %v1332 = vld [vmem:[%s636] sm:$0xff]
        %v1333 = vld [vmem:[%s636 + $0x8] sm:$0xff]
        %v1334 = vld [vmem:[%s636 + $0x10] sm:$0xff]
        %v1335 = vld [vmem:[%s636 + $0x18] sm:$0xff]
        %vm1336 = vcmask 261120
        %v1338 = vsel %vm1336, %v1316, 0
        %v1341 = vsel %vm1336, %v1317, 0
        %v1344 = vsel %vm1336, %v1318, 0
        %v1347 = vsel %vm1336, %v1319, 0
        %v1350 = vsel %vm1336, %v1320, 0
        %v1353 = vsel %vm1336, %v1321, 0
        %v1356 = vsel %vm1336, %v1322, 0
        %v1359 = vsel %vm1336, %v1323, 0
        %v1362 = vsel %vm1336, %v1324, 0
        %v1365 = vsel %vm1336, %v1325, 0
        %v1368 = vsel %vm1336, %v1326, 0
        %v1371 = vsel %vm1336, %v1327, 0
        %v1374 = vsel %vm1336, %v1328, 0
        %v1377 = vsel %vm1336, %v1329, 0
        %v1380 = vsel %vm1336, %v1330, 0
        %v1383 = vsel %vm1336, %v1331, 0
        %1385 = vmatprep.subr.mxu0 0.0
        %1386 = vmatpush1.msra.mxu0 %v1332
        %1387 = vmatprep.subr.mxu0 0.0
        %1388 = vmatpush1.msra.mxu0 %v1333
        %1389 = vmatprep.subr.mxu0 0.0
        %1390 = vmatpush1.msra.mxu0 %v1334
        %1391 = vmatprep.subr.mxu0 0.0
        %1392 = vmatpush1.msra.mxu0 %v1335
        %1393 = vmatprep.subr.mxu0 0.0
        %1394 = vmatpush1.msra.mxu0 0.0
        %1395 = vmatprep.subr.mxu0 0.0
        %1396 = vmatpush1.msra.mxu0 0.0
        %1397 = vmatprep.subr.mxu0 0.0
        %1398 = vmatpush1.msra.mxu0 0.0
        %1399 = vmatprep.subr.mxu0 0.0
        %1400 = vmatpush1.msra.mxu0 0.0
        %1401 = vmatprep.subr.mxu0 0.0
        %1402 = vmatpush1.msra.mxu0 0.0
        %1403 = vmatprep.subr.mxu0 0.0
        %1404 = vmatpush1.msra.mxu0 0.0
        %1405 = vmatprep.subr.mxu0 0.0
        %1406 = vmatpush1.msra.mxu0 0.0
        %1407 = vmatprep.subr.mxu0 0.0
        %1408 = vmatpush1.msra.mxu0 0.0
        %1409 = vmatprep.subr.mxu0 0.0
        %1410 = vmatpush1.msra.mxu0 0.0
        %1411 = vmatprep.subr.mxu0 0.0
        %1412 = vmatpush1.msra.mxu0 0.0
        %1413 = vmatprep.subr.mxu0 0.0
        %1414 = vmatpush1.msra.mxu0 0.0
        %1415 = vmatprep.subr.mxu0 0.0
        %1416 = vmatpush1.msra.mxu0 0.0
        %1417 = vmatprep.subr.mxu0 0.0
        %1418 = vmatpush1.msra.mxu0 0.0
        %1419 = vmatprep.subr.mxu0 0.0
        %1420 = vmatpush1.msra.mxu0 0.0
        %1421 = vmatprep.subr.mxu0 0.0
        %1422 = vmatpush1.msra.mxu0 0.0
        %1423 = vmatprep.subr.mxu0 0.0
        %1424 = vmatpush1.msra.mxu0 0.0
        %1425 = vmatprep.subr.mxu0 0.0
        %1426 = vmatpush1.msra.mxu0 0.0
        %1427 = vmatprep.subr.mxu0 0.0
        %1428 = vmatpush1.msra.mxu0 0.0
        %1429 = vmatprep.subr.mxu0 0.0
        %1430 = vmatpush1.msra.mxu0 0.0
        %1431 = vmatprep.subr.mxu0 0.0
        %1432 = vmatpush1.msra.mxu0 0.0
        %1433 = vmatprep.subr.mxu0 0.0
        %1434 = vmatpush1.msra.mxu0 0.0
        %1435 = vmatprep.subr.mxu0 0.0
        %1436 = vmatpush1.msra.mxu0 0.0
        %1437 = vmatprep.subr.mxu0 0.0
        %1438 = vmatpush1.msra.mxu0 0.0
        %1439 = vmatprep.subr.mxu0 0.0
        %1440 = vmatpush1.msra.mxu0 0.0
        %1441 = vmatprep.subr.mxu0 0.0
        %1442 = vmatpush1.msra.mxu0 0.0
        %1443 = vmatprep.subr.mxu0 0.0
        %1444 = vmatpush1.msra.mxu0 0.0
        %1445 = vmatprep.subr.mxu0 0.0
        %1446 = vmatpush1.msra.mxu0 0.0
        %1447 = vmatprep.subr.mxu0 0.0
        %1448 = vmatpush1.msra.mxu0 0.0
        %1449 = vmatprep.mubr.f32.mxu0 0.0
        %1450 = vmatmul.mubr.f32.gmra.mrb[0].mxu0 %v1338
        %v1451 = vpop.f32.mrb[0].mxu0
        %v1452 = vadd.f32 0.0, %v1451
        %v1453 = vpop.f32.mrb[0].mxu0
        %1454 = vmatprep.mubr.f32.mxu0 0.0
        %1455 = vmatmul.mubr.f32.gmra.mrb[0].mxu0 %v1341
        %v1456 = vpop.f32.mrb[0].mxu0
        %v1457 = vadd.f32 0.0, %v1456
        %v1458 = vpop.f32.mrb[0].mxu0
        %1459 = vmatprep.mubr.f32.mxu0 0.0
        %1460 = vmatmul.mubr.f32.gmra.mrb[0].mxu0 %v1344
        %v1461 = vpop.f32.mrb[0].mxu0
        %v1462 = vadd.f32 0.0, %v1461
        %v1463 = vpop.f32.mrb[0].mxu0
        %1464 = vmatprep.mubr.f32.mxu0 0.0
        %1465 = vmatmul.mubr.f32.gmra.mrb[0].mxu0 %v1347
        %v1466 = vpop.f32.mrb[0].mxu0
        %v1467 = vadd.f32 0.0, %v1466
        %v1468 = vpop.f32.mrb[0].mxu0
        %1469 = vmatprep.mubr.f32.mxu0 0.0
        %1470 = vmatmul.mubr.f32.gmra.mrb[0].mxu0 %v1350
        %v1471 = vpop.f32.mrb[0].mxu0
        %v1472 = vadd.f32 0.0, %v1471
        %v1473 = vpop.f32.mrb[0].mxu0
        %1474 = vmatprep.mubr.f32.mxu0 0.0
        %1475 = vmatmul.mubr.f32.gmra.mrb[0].mxu0 %v1353
        %v1476 = vpop.f32.mrb[0].mxu0
        %v1477 = vadd.f32 0.0, %v1476
        %v1478 = vpop.f32.mrb[0].mxu0
        %1479 = vmatprep.mubr.f32.mxu0 0.0
        %1480 = vmatmul.mubr.f32.gmra.mrb[0].mxu0 %v1356
        %v1481 = vpop.f32.mrb[0].mxu0
        %v1482 = vadd.f32 0.0, %v1481
        %v1483 = vpop.f32.mrb[0].mxu0
        %1484 = vmatprep.mubr.f32.mxu0 0.0
        %1485 = vmatmul.mubr.f32.gmra.mrb[0].mxu0 %v1359
        %v1486 = vpop.f32.mrb[0].mxu0
        %v1487 = vadd.f32 0.0, %v1486
        %v1488 = vpop.f32.mrb[0].mxu0
        %1489 = vmatprep.mubr.f32.mxu0 0.0
        %1490 = vmatmul.mubr.f32.gmra.mrb[0].mxu0 %v1362
        %v1491 = vpop.f32.mrb[0].mxu0
        %v1492 = vadd.f32 0.0, %v1491
        %v1493 = vpop.f32.mrb[0].mxu0
        %1494 = vmatprep.mubr.f32.mxu0 0.0
        %1495 = vmatmul.mubr.f32.gmra.mrb[0].mxu0 %v1365
        %v1496 = vpop.f32.mrb[0].mxu0
        %v1497 = vadd.f32 0.0, %v1496
        %v1498 = vpop.f32.mrb[0].mxu0
        %1499 = vmatprep.mubr.f32.mxu0 0.0
        %1500 = vmatmul.mubr.f32.gmra.mrb[0].mxu0 %v1368
        %v1501 = vpop.f32.mrb[0].mxu0
        %v1502 = vadd.f32 0.0, %v1501
        %v1503 = vpop.f32.mrb[0].mxu0
        %1504 = vmatprep.mubr.f32.mxu0 0.0
        %1505 = vmatmul.mubr.f32.gmra.mrb[0].mxu0 %v1371
        %v1506 = vpop.f32.mrb[0].mxu0
        %v1507 = vadd.f32 0.0, %v1506
        %v1508 = vpop.f32.mrb[0].mxu0
        %1509 = vmatprep.mubr.f32.mxu0 0.0
        %1510 = vmatmul.mubr.f32.gmra.mrb[0].mxu0 %v1374
        %v1511 = vpop.f32.mrb[0].mxu0
        %v1512 = vadd.f32 0.0, %v1511
        %v1513 = vpop.f32.mrb[0].mxu0
        %1514 = vmatprep.mubr.f32.mxu0 0.0
        %1515 = vmatmul.mubr.f32.gmra.mrb[0].mxu0 %v1377
        %v1516 = vpop.f32.mrb[0].mxu0
        %v1517 = vadd.f32 0.0, %v1516
        %v1518 = vpop.f32.mrb[0].mxu0
        %1519 = vmatprep.mubr.f32.mxu0 0.0
        %1520 = vmatmul.mubr.f32.gmra.mrb[0].mxu0 %v1380
        %v1521 = vpop.f32.mrb[0].mxu0
        %v1522 = vadd.f32 0.0, %v1521
        %v1523 = vpop.f32.mrb[0].mxu0
        %1524 = vmatprep.mubr.f32.mxu0 0.0
        %1525 = vmatmul.mubr.f32.gmra.mrb[0].mxu0 %v1383
        %v1526 = vpop.f32.mrb[0].mxu0
        %v1527 = vadd.f32 0.0, %v1526
        %v1528 = vpop.f32.mrb[0].mxu0
        %1529 = vdwg.mxu0
        %v1530 = vadd.f32 %v1078, %v1452
        %v1531 = vadd.f32 %v1083, %v1457
        %v1532 = vadd.f32 %v1088, %v1462
        %v1533 = vadd.f32 %v1093, %v1467
        %v1534 = vadd.f32 %v1098, %v1472
        %v1535 = vadd.f32 %v1103, %v1477
        %v1536 = vadd.f32 %v1108, %v1482
        %v1537 = vadd.f32 %v1113, %v1487
        %v1538 = vadd.f32 %v1118, %v1492
        %v1539 = vadd.f32 %v1123, %v1497
        %v1540 = vadd.f32 %v1128, %v1502
        %v1541 = vadd.f32 %v1133, %v1507
        %v1542 = vadd.f32 %v1138, %v1512
        %v1543 = vadd.f32 %v1143, %v1517
        %v1544 = vadd.f32 %v1148, %v1522
        %v1545 = vadd.f32 %v1153, %v1527
        %v1546 = vtanh.pop %v1530
        %v1547 = vtanh.pop %v1531
        %v1548 = vtanh.pop %v1532
        %v1549 = vtanh.pop %v1533
        %v1550 = vtanh.pop %v1534
        %v1551 = vtanh.pop %v1535
        %v1552 = vtanh.pop %v1536
        %v1553 = vtanh.pop %v1537
        %v1554 = vtanh.pop %v1538
        %v1555 = vtanh.pop %v1539
        %v1556 = vtanh.pop %v1540
        %v1557 = vtanh.pop %v1541
        %v1558 = vtanh.pop %v1542
        %v1559 = vtanh.pop %v1543
        %v1560 = vtanh.pop %v1544
        %v1561 = vtanh.pop %v1545
        %v1563 = vsel %vm1336, %v1546, 0
        %v1566 = vsel %vm1336, %v1547, 0
        %v1569 = vsel %vm1336, %v1548, 0
        %v1572 = vsel %vm1336, %v1549, 0
        %v1575 = vsel %vm1336, %v1550, 0
        %v1578 = vsel %vm1336, %v1551, 0
        %v1581 = vsel %vm1336, %v1552, 0
        %v1584 = vsel %vm1336, %v1553, 0
        %v1587 = vsel %vm1336, %v1554, 0
        %v1590 = vsel %vm1336, %v1555, 0
        %v1593 = vsel %vm1336, %v1556, 0
        %v1596 = vsel %vm1336, %v1557, 0
        %v1599 = vsel %vm1336, %v1558, 0
        %v1602 = vsel %vm1336, %v1559, 0
        %v1605 = vsel %vm1336, %v1560, 0
        %v1608 = vsel %vm1336, %v1561, 0
        %1610 = vmatprep.subr.mxu0 0.0
        %1611 = vmatpush1.msra.mxu0 %v1332
        %1612 = vmatprep.subr.mxu0 0.0
        %1613 = vmatpush1.msra.mxu0 %v1333
        %1614 = vmatprep.subr.mxu0 0.0
        %1615 = vmatpush1.msra.mxu0 %v1334
        %1616 = vmatprep.subr.mxu0 0.0
        %1617 = vmatpush1.msra.mxu0 %v1335
        %1618 = vmatprep.subr.mxu0 0.0
        %1619 = vmatpush1.msra.mxu0 0.0
        %1620 = vmatprep.subr.mxu0 0.0
        %1621 = vmatpush1.msra.mxu0 0.0
        %1622 = vmatprep.subr.mxu0 0.0
        %1623 = vmatpush1.msra.mxu0 0.0
        %1624 = vmatprep.subr.mxu0 0.0
        %1625 = vmatpush1.msra.mxu0 0.0
        %1626 = vmatprep.subr.mxu0 0.0
        %1627 = vmatpush1.msra.mxu0 0.0
        %1628 = vmatprep.subr.mxu0 0.0
        %1629 = vmatpush1.msra.mxu0 0.0
        %1630 = vmatprep.subr.mxu0 0.0
        %1631 = vmatpush1.msra.mxu0 0.0
        %1632 = vmatprep.subr.mxu0 0.0
        %1633 = vmatpush1.msra.mxu0 0.0
        %1634 = vmatprep.subr.mxu0 0.0
        %1635 = vmatpush1.msra.mxu0 0.0
        %1636 = vmatprep.subr.mxu0 0.0
        %1637 = vmatpush1.msra.mxu0 0.0
        %1638 = vmatprep.subr.mxu0 0.0
        %1639 = vmatpush1.msra.mxu0 0.0
        %1640 = vmatprep.subr.mxu0 0.0
        %1641 = vmatpush1.msra.mxu0 0.0
        %1642 = vmatprep.subr.mxu0 0.0
        %1643 = vmatpush1.msra.mxu0 0.0
        %1644 = vmatprep.subr.mxu0 0.0
        %1645 = vmatpush1.msra.mxu0 0.0
        %1646 = vmatprep.subr.mxu0 0.0
        %1647 = vmatpush1.msra.mxu0 0.0
        %1648 = vmatprep.subr.mxu0 0.0
        %1649 = vmatpush1.msra.mxu0 0.0
        %1650 = vmatprep.subr.mxu0 0.0
        %1651 = vmatpush1.msra.mxu0 0.0
        %1652 = vmatprep.subr.mxu0 0.0
        %1653 = vmatpush1.msra.mxu0 0.0
        %1654 = vmatprep.subr.mxu0 0.0
        %1655 = vmatpush1.msra.mxu0 0.0
        %1656 = vmatprep.subr.mxu0 0.0
        %1657 = vmatpush1.msra.mxu0 0.0
        %1658 = vmatprep.subr.mxu0 0.0
        %1659 = vmatpush1.msra.mxu0 0.0
        %1660 = vmatprep.subr.mxu0 0.0
        %1661 = vmatpush1.msra.mxu0 0.0
        %1662 = vmatprep.subr.mxu0 0.0
        %1663 = vmatpush1.msra.mxu0 0.0
        %1664 = vmatprep.subr.mxu0 0.0
        %1665 = vmatpush1.msra.mxu0 0.0
        %1666 = vmatprep.subr.mxu0 0.0
        %1667 = vmatpush1.msra.mxu0 0.0
        %1668 = vmatprep.subr.mxu0 0.0
        %1669 = vmatpush1.msra.mxu0 0.0
        %1670 = vmatprep.subr.mxu0 0.0
        %1671 = vmatpush1.msra.mxu0 0.0
        %1672 = vmatprep.subr.mxu0 0.0
        %1673 = vmatpush1.msra.mxu0 0.0
        %1674 = vmatprep.mubr.f32.mxu0 0.0
        %1675 = vmatmul.mubr.f32.gmra.mrb[0].mxu0 %v1563
        %v1676 = vpop.f32.mrb[0].mxu0
        %v1677 = vadd.f32 0.0, %v1676
        %v1678 = vpop.f32.mrb[0].mxu0
        %1679 = vmatprep.mubr.f32.mxu0 0.0
        %1680 = vmatmul.mubr.f32.gmra.mrb[0].mxu0 %v1566
        %v1681 = vpop.f32.mrb[0].mxu0
        %v1682 = vadd.f32 0.0, %v1681
        %v1683 = vpop.f32.mrb[0].mxu0
        %1684 = vmatprep.mubr.f32.mxu0 0.0
        %1685 = vmatmul.mubr.f32.gmra.mrb[0].mxu0 %v1569
        %v1686 = vpop.f32.mrb[0].mxu0
        %v1687 = vadd.f32 0.0, %v1686
        %v1688 = vpop.f32.mrb[0].mxu0
        %1689 = vmatprep.mubr.f32.mxu0 0.0
        %1690 = vmatmul.mubr.f32.gmra.mrb[0].mxu0 %v1572
        %v1691 = vpop.f32.mrb[0].mxu0
        %v1692 = vadd.f32 0.0, %v1691
        %v1693 = vpop.f32.mrb[0].mxu0
        %1694 = vmatprep.mubr.f32.mxu0 0.0
        %1695 = vmatmul.mubr.f32.gmra.mrb[0].mxu0 %v1575
        %v1696 = vpop.f32.mrb[0].mxu0
        %v1697 = vadd.f32 0.0, %v1696
        %v1698 = vpop.f32.mrb[0].mxu0
        %1699 = vmatprep.mubr.f32.mxu0 0.0
        %1700 = vmatmul.mubr.f32.gmra.mrb[0].mxu0 %v1578
        %v1701 = vpop.f32.mrb[0].mxu0
        %v1702 = vadd.f32 0.0, %v1701
        %v1703 = vpop.f32.mrb[0].mxu0
        %1704 = vmatprep.mubr.f32.mxu0 0.0
        %1705 = vmatmul.mubr.f32.gmra.mrb[0].mxu0 %v1581
        %v1706 = vpop.f32.mrb[0].mxu0
        %v1707 = vadd.f32 0.0, %v1706
        %v1708 = vpop.f32.mrb[0].mxu0
        %1709 = vmatprep.mubr.f32.mxu0 0.0
        %1710 = vmatmul.mubr.f32.gmra.mrb[0].mxu0 %v1584
        %v1711 = vpop.f32.mrb[0].mxu0
        %v1712 = vadd.f32 0.0, %v1711
        %v1713 = vpop.f32.mrb[0].mxu0
        %1714 = vmatprep.mubr.f32.mxu0 0.0
        %1715 = vmatmul.mubr.f32.gmra.mrb[0].mxu0 %v1587
        %v1716 = vpop.f32.mrb[0].mxu0
        %v1717 = vadd.f32 0.0, %v1716
        %v1718 = vpop.f32.mrb[0].mxu0
        %1719 = vmatprep.mubr.f32.mxu0 0.0
        %1720 = vmatmul.mubr.f32.gmra.mrb[0].mxu0 %v1590
        %v1721 = vpop.f32.mrb[0].mxu0
        %v1722 = vadd.f32 0.0, %v1721
        %v1723 = vpop.f32.mrb[0].mxu0
        %1724 = vmatprep.mubr.f32.mxu0 0.0
        %1725 = vmatmul.mubr.f32.gmra.mrb[0].mxu0 %v1593
        %v1726 = vpop.f32.mrb[0].mxu0
        %v1727 = vadd.f32 0.0, %v1726
        %v1728 = vpop.f32.mrb[0].mxu0
        %1729 = vmatprep.mubr.f32.mxu0 0.0
        %1730 = vmatmul.mubr.f32.gmra.mrb[0].mxu0 %v1596
        %v1731 = vpop.f32.mrb[0].mxu0
        %v1732 = vadd.f32 0.0, %v1731
        %v1733 = vpop.f32.mrb[0].mxu0
        %1734 = vmatprep.mubr.f32.mxu0 0.0
        %1735 = vmatmul.mubr.f32.gmra.mrb[0].mxu0 %v1599
        %v1736 = vpop.f32.mrb[0].mxu0
        %v1737 = vadd.f32 0.0, %v1736
        %v1738 = vpop.f32.mrb[0].mxu0
        %1739 = vmatprep.mubr.f32.mxu0 0.0
        %1740 = vmatmul.mubr.f32.gmra.mrb[0].mxu0 %v1602
        %v1741 = vpop.f32.mrb[0].mxu0
        %v1742 = vadd.f32 0.0, %v1741
        %v1743 = vpop.f32.mrb[0].mxu0
        %1744 = vmatprep.mubr.f32.mxu0 0.0
        %1745 = vmatmul.mubr.f32.gmra.mrb[0].mxu0 %v1605
        %v1746 = vpop.f32.mrb[0].mxu0
        %v1747 = vadd.f32 0.0, %v1746
        %v1748 = vpop.f32.mrb[0].mxu0
        %1749 = vmatprep.mubr.f32.mxu0 0.0
        %1750 = vmatmul.mubr.f32.gmra.mrb[0].mxu0 %v1608
        %v1751 = vpop.f32.mrb[0].mxu0
        %v1752 = vadd.f32 0.0, %v1751
        %v1753 = vpop.f32.mrb[0].mxu0
        %1754 = vdwg.mxu0
        %v1755 = vadd.f32 %v1158, %v1677
        %v1756 = vadd.f32 %v1163, %v1682
        %v1757 = vadd.f32 %v1168, %v1687
        %v1758 = vadd.f32 %v1173, %v1692
        %v1759 = vadd.f32 %v1178, %v1697
        %v1760 = vadd.f32 %v1183, %v1702
        %v1761 = vadd.f32 %v1188, %v1707
        %v1762 = vadd.f32 %v1193, %v1712
        %v1763 = vadd.f32 %v1198, %v1717
        %v1764 = vadd.f32 %v1203, %v1722
        %v1765 = vadd.f32 %v1208, %v1727
        %v1766 = vadd.f32 %v1213, %v1732
        %v1767 = vadd.f32 %v1218, %v1737
        %v1768 = vadd.f32 %v1223, %v1742
        %v1769 = vadd.f32 %v1228, %v1747
        %v1770 = vadd.f32 %v1233, %v1752
        %v1771 = vtanh.pop %v1755
        %v1772 = vtanh.pop %v1756
        %v1773 = vtanh.pop %v1757
        %v1774 = vtanh.pop %v1758
        %v1775 = vtanh.pop %v1759
        %v1776 = vtanh.pop %v1760
        %v1777 = vtanh.pop %v1761
        %v1778 = vtanh.pop %v1762
        %v1779 = vtanh.pop %v1763
        %v1780 = vtanh.pop %v1764
        %v1781 = vtanh.pop %v1765
        %v1782 = vtanh.pop %v1766
        %v1783 = vtanh.pop %v1767
        %v1784 = vtanh.pop %v1768
        %v1785 = vtanh.pop %v1769
        %v1786 = vtanh.pop %v1770
        %v1788 = vsel %vm1336, %v1771, 0
        %v1791 = vsel %vm1336, %v1772, 0
        %v1794 = vsel %vm1336, %v1773, 0
        %v1797 = vsel %vm1336, %v1774, 0
        %v1800 = vsel %vm1336, %v1775, 0
        %v1803 = vsel %vm1336, %v1776, 0
        %v1806 = vsel %vm1336, %v1777, 0
        %v1809 = vsel %vm1336, %v1778, 0
        %v1812 = vsel %vm1336, %v1779, 0
        %v1815 = vsel %vm1336, %v1780, 0
        %v1818 = vsel %vm1336, %v1781, 0
        %v1821 = vsel %vm1336, %v1782, 0
        %v1824 = vsel %vm1336, %v1783, 0
        %v1827 = vsel %vm1336, %v1784, 0
        %v1830 = vsel %vm1336, %v1785, 0
        %v1833 = vsel %vm1336, %v1786, 0
        %1835 = vmatprep.subr.mxu0 0.0
        %1836 = vmatpush1.msra.mxu0 %v1332
        %1837 = vmatprep.subr.mxu0 0.0
        %1838 = vmatpush1.msra.mxu0 %v1333
        %1839 = vmatprep.subr.mxu0 0.0
        %1840 = vmatpush1.msra.mxu0 %v1334
        %1841 = vmatprep.subr.mxu0 0.0
        %1842 = vmatpush1.msra.mxu0 %v1335
        %1843 = vmatprep.subr.mxu0 0.0
        %1844 = vmatpush1.msra.mxu0 0.0
        %1845 = vmatprep.subr.mxu0 0.0
        %1846 = vmatpush1.msra.mxu0 0.0
        %1847 = vmatprep.subr.mxu0 0.0
        %1848 = vmatpush1.msra.mxu0 0.0
        %1849 = vmatprep.subr.mxu0 0.0
        %1850 = vmatpush1.msra.mxu0 0.0
        %1851 = vmatprep.subr.mxu0 0.0
        %1852 = vmatpush1.msra.mxu0 0.0
        %1853 = vmatprep.subr.mxu0 0.0
        %1854 = vmatpush1.msra.mxu0 0.0
        %1855 = vmatprep.subr.mxu0 0.0
        %1856 = vmatpush1.msra.mxu0 0.0
        %1857 = vmatprep.subr.mxu0 0.0
        %1858 = vmatpush1.msra.mxu0 0.0
        %1859 = vmatprep.subr.mxu0 0.0
        %1860 = vmatpush1.msra.mxu0 0.0
        %1861 = vmatprep.subr.mxu0 0.0
        %1862 = vmatpush1.msra.mxu0 0.0
        %1863 = vmatprep.subr.mxu0 0.0
        %1864 = vmatpush1.msra.mxu0 0.0
        %1865 = vmatprep.subr.mxu0 0.0
        %1866 = vmatpush1.msra.mxu0 0.0
        %1867 = vmatprep.subr.mxu0 0.0
        %1868 = vmatpush1.msra.mxu0 0.0
        %1869 = vmatprep.subr.mxu0 0.0
        %1870 = vmatpush1.msra.mxu0 0.0
        %1871 = vmatprep.subr.mxu0 0.0
        %1872 = vmatpush1.msra.mxu0 0.0
        %1873 = vmatprep.subr.mxu0 0.0
        %1874 = vmatpush1.msra.mxu0 0.0
        %1875 = vmatprep.subr.mxu0 0.0
        %1876 = vmatpush1.msra.mxu0 0.0
        %1877 = vmatprep.subr.mxu0 0.0
        %1878 = vmatpush1.msra.mxu0 0.0
        %1879 = vmatprep.subr.mxu0 0.0
        %1880 = vmatpush1.msra.mxu0 0.0
        %1881 = vmatprep.subr.mxu0 0.0
        %1882 = vmatpush1.msra.mxu0 0.0
        %1883 = vmatprep.subr.mxu0 0.0
        %1884 = vmatpush1.msra.mxu0 0.0
        %1885 = vmatprep.subr.mxu0 0.0
        %1886 = vmatpush1.msra.mxu0 0.0
        %1887 = vmatprep.subr.mxu0 0.0
        %1888 = vmatpush1.msra.mxu0 0.0
        %1889 = vmatprep.subr.mxu0 0.0
        %1890 = vmatpush1.msra.mxu0 0.0
        %1891 = vmatprep.subr.mxu0 0.0
        %1892 = vmatpush1.msra.mxu0 0.0
        %1893 = vmatprep.subr.mxu0 0.0
        %1894 = vmatpush1.msra.mxu0 0.0
        %1895 = vmatprep.subr.mxu0 0.0
        %1896 = vmatpush1.msra.mxu0 0.0
        %1897 = vmatprep.subr.mxu0 0.0
        %1898 = vmatpush1.msra.mxu0 0.0
        %1899 = vmatprep.mubr.f32.mxu0 0.0
        %1900 = vmatmul.mubr.f32.gmra.mrb[0].mxu0 %v1788
        %v1901 = vpop.f32.mrb[0].mxu0
        %v1902 = vadd.f32 0.0, %v1901
        %v1903 = vpop.f32.mrb[0].mxu0
        %1904 = vmatprep.mubr.f32.mxu0 0.0
        %1905 = vmatmul.mubr.f32.gmra.mrb[0].mxu0 %v1791
        %v1906 = vpop.f32.mrb[0].mxu0
        %v1907 = vadd.f32 0.0, %v1906
        %v1908 = vpop.f32.mrb[0].mxu0
        %1909 = vmatprep.mubr.f32.mxu0 0.0
        %1910 = vmatmul.mubr.f32.gmra.mrb[0].mxu0 %v1794
        %v1911 = vpop.f32.mrb[0].mxu0
        %v1912 = vadd.f32 0.0, %v1911
        %v1913 = vpop.f32.mrb[0].mxu0
        %1914 = vmatprep.mubr.f32.mxu0 0.0
        %1915 = vmatmul.mubr.f32.gmra.mrb[0].mxu0 %v1797
        %v1916 = vpop.f32.mrb[0].mxu0
        %v1917 = vadd.f32 0.0, %v1916
        %v1918 = vpop.f32.mrb[0].mxu0
        %1919 = vmatprep.mubr.f32.mxu0 0.0
        %1920 = vmatmul.mubr.f32.gmra.mrb[0].mxu0 %v1800
        %v1921 = vpop.f32.mrb[0].mxu0
        %v1922 = vadd.f32 0.0, %v1921
        %v1923 = vpop.f32.mrb[0].mxu0
        %1924 = vmatprep.mubr.f32.mxu0 0.0
        %1925 = vmatmul.mubr.f32.gmra.mrb[0].mxu0 %v1803
        %v1926 = vpop.f32.mrb[0].mxu0
        %v1927 = vadd.f32 0.0, %v1926
        %v1928 = vpop.f32.mrb[0].mxu0
        %1929 = vmatprep.mubr.f32.mxu0 0.0
        %1930 = vmatmul.mubr.f32.gmra.mrb[0].mxu0 %v1806
        %v1931 = vpop.f32.mrb[0].mxu0
        %v1932 = vadd.f32 0.0, %v1931
        %v1933 = vpop.f32.mrb[0].mxu0
        %1934 = vmatprep.mubr.f32.mxu0 0.0
        %1935 = vmatmul.mubr.f32.gmra.mrb[0].mxu0 %v1809
        %v1936 = vpop.f32.mrb[0].mxu0
        %v1937 = vadd.f32 0.0, %v1936
        %v1938 = vpop.f32.mrb[0].mxu0
        %1939 = vmatprep.mubr.f32.mxu0 0.0
        %1940 = vmatmul.mubr.f32.gmra.mrb[0].mxu0 %v1812
        %v1941 = vpop.f32.mrb[0].mxu0
        %v1942 = vadd.f32 0.0, %v1941
        %v1943 = vpop.f32.mrb[0].mxu0
        %1944 = vmatprep.mubr.f32.mxu0 0.0
        %1945 = vmatmul.mubr.f32.gmra.mrb[0].mxu0 %v1815
        %v1946 = vpop.f32.mrb[0].mxu0
        %v1947 = vadd.f32 0.0, %v1946
        %v1948 = vpop.f32.mrb[0].mxu0
        %1949 = vmatprep.mubr.f32.mxu0 0.0
        %1950 = vmatmul.mubr.f32.gmra.mrb[0].mxu0 %v1818
        %v1951 = vpop.f32.mrb[0].mxu0
        %v1952 = vadd.f32 0.0, %v1951
        %v1953 = vpop.f32.mrb[0].mxu0
        %1954 = vmatprep.mubr.f32.mxu0 0.0
        %1955 = vmatmul.mubr.f32.gmra.mrb[0].mxu0 %v1821
        %v1956 = vpop.f32.mrb[0].mxu0
        %v1957 = vadd.f32 0.0, %v1956
        %v1958 = vpop.f32.mrb[0].mxu0
        %1959 = vmatprep.mubr.f32.mxu0 0.0
        %1960 = vmatmul.mubr.f32.gmra.mrb[0].mxu0 %v1824
        %v1961 = vpop.f32.mrb[0].mxu0
        %v1962 = vadd.f32 0.0, %v1961
        %v1963 = vpop.f32.mrb[0].mxu0
        %1964 = vmatprep.mubr.f32.mxu0 0.0
        %1965 = vmatmul.mubr.f32.gmra.mrb[0].mxu0 %v1827
        %v1966 = vpop.f32.mrb[0].mxu0
        %v1967 = vadd.f32 0.0, %v1966
        %v1968 = vpop.f32.mrb[0].mxu0
        %1969 = vmatprep.mubr.f32.mxu0 0.0
        %1970 = vmatmul.mubr.f32.gmra.mrb[0].mxu0 %v1830
        %v1971 = vpop.f32.mrb[0].mxu0
        %v1972 = vadd.f32 0.0, %v1971
        %v1973 = vpop.f32.mrb[0].mxu0
        %1974 = vmatprep.mubr.f32.mxu0 0.0
        %1975 = vmatmul.mubr.f32.gmra.mrb[0].mxu0 %v1833
        %v1976 = vpop.f32.mrb[0].mxu0
        %v1977 = vadd.f32 0.0, %v1976
        %v1978 = vpop.f32.mrb[0].mxu0
        %1979 = vdwg.mxu0
        %v1980 = vadd.f32 %v1238, %v1902
        %v1981 = vadd.f32 %v1243, %v1907
        %v1982 = vadd.f32 %v1248, %v1912
        %v1983 = vadd.f32 %v1253, %v1917
        %v1984 = vadd.f32 %v1258, %v1922
        %v1985 = vadd.f32 %v1263, %v1927
        %v1986 = vadd.f32 %v1268, %v1932
        %v1987 = vadd.f32 %v1273, %v1937
        %v1988 = vadd.f32 %v1278, %v1942
        %v1989 = vadd.f32 %v1283, %v1947
        %v1990 = vadd.f32 %v1288, %v1952
        %v1991 = vadd.f32 %v1293, %v1957
        %v1992 = vadd.f32 %v1298, %v1962
        %v1993 = vadd.f32 %v1303, %v1967
        %v1994 = vadd.f32 %v1308, %v1972
        %v1995 = vadd.f32 %v1313, %v1977
        %v1996 = vtanh.pop %v1980
        %v1997 = vtanh.pop %v1981
        %v1998 = vtanh.pop %v1982
        %v1999 = vtanh.pop %v1983
        %v2000 = vtanh.pop %v1984
        %v2001 = vtanh.pop %v1985
        %v2002 = vtanh.pop %v1986
        %v2003 = vtanh.pop %v1987
        %v2004 = vtanh.pop %v1988
        %v2005 = vtanh.pop %v1989
        %v2006 = vtanh.pop %v1990
        %v2007 = vtanh.pop %v1991
        %v2008 = vtanh.pop %v1992
        %v2009 = vtanh.pop %v1993
        %v2010 = vtanh.pop %v1994
        %v2011 = vtanh.pop %v1995
        %2012 = vst.msk [vmem:[%s653] sm:$0xff] %vm1336, %v1996
        %2013 = vst.msk [vmem:[%s653 + $0x8] sm:$0xff] %vm1336, %v1997
        %2014 = vst.msk [vmem:[%s653 + $0x10] sm:$0xff] %vm1336, %v1998
        %2015 = vst.msk [vmem:[%s653 + $0x18] sm:$0xff] %vm1336, %v1999
        %2016 = vst.msk [vmem:[%s653 + $0x20] sm:$0xff] %vm1336, %v2000
        %2017 = vst.msk [vmem:[%s653 + $0x28] sm:$0xff] %vm1336, %v2001
        %2018 = vst.msk [vmem:[%s653 + $0x30] sm:$0xff] %vm1336, %v2002
        %2019 = vst.msk [vmem:[%s653 + $0x38] sm:$0xff] %vm1336, %v2003
        %2020 = vst.msk [vmem:[%s653 + $0x40] sm:$0xff] %vm1336, %v2004
        %2021 = vst.msk [vmem:[%s653 + $0x48] sm:$0xff] %vm1336, %v2005
        %2022 = vst.msk [vmem:[%s653 + $0x50] sm:$0xff] %vm1336, %v2006
        %2023 = vst.msk [vmem:[%s653 + $0x58] sm:$0xff] %vm1336, %v2007
        %2024 = vst.msk [vmem:[%s653 + $0x60] sm:$0xff] %vm1336, %v2008
        %2025 = vst.msk [vmem:[%s653 + $0x68] sm:$0xff] %vm1336, %v2009
        %2026 = vst.msk [vmem:[%s653 + $0x70] sm:$0xff] %vm1336, %v2010
        %2027 = vst.msk [vmem:[%s653 + $0x78] sm:$0xff] %vm1336, %v2011
        %v2028 = vld [vmem:[%s644] sm:$0xff]
        %v2029 = vld [vmem:[%s644 + $0x8] sm:$0xff]
        %v2030 = vld [vmem:[%s644 + $0x10] sm:$0xff]
        %v2031 = vld [vmem:[%s644 + $0x18] sm:$0xff]
        %v2033 = vsel %vm1336, %v1996, 0
        %v2036 = vsel %vm1336, %v1997, 0
        %v2039 = vsel %vm1336, %v1998, 0
        %v2042 = vsel %vm1336, %v1999, 0
        %v2045 = vsel %vm1336, %v2000, 0
        %v2048 = vsel %vm1336, %v2001, 0
        %v2051 = vsel %vm1336, %v2002, 0
        %v2054 = vsel %vm1336, %v2003, 0
        %v2057 = vsel %vm1336, %v2004, 0
        %v2060 = vsel %vm1336, %v2005, 0
        %v2063 = vsel %vm1336, %v2006, 0
        %v2066 = vsel %vm1336, %v2007, 0
        %v2069 = vsel %vm1336, %v2008, 0
        %v2072 = vsel %vm1336, %v2009, 0
        %v2075 = vsel %vm1336, %v2010, 0
        %v2078 = vsel %vm1336, %v2011, 0
        %2080 = vmatprep.subr.mxu0 0.0
        %2081 = vmatpush1.msra.mxu0 %v2028
        %2082 = vmatprep.subr.mxu0 0.0
        %2083 = vmatpush1.msra.mxu0 %v2029
        %2084 = vmatprep.subr.mxu0 0.0
        %2085 = vmatpush1.msra.mxu0 %v2030
        %2086 = vmatprep.subr.mxu0 0.0
        %2087 = vmatpush1.msra.mxu0 %v2031
        %2088 = vmatprep.subr.mxu0 0.0
        %2089 = vmatpush1.msra.mxu0 0.0
        %2090 = vmatprep.subr.mxu0 0.0
        %2091 = vmatpush1.msra.mxu0 0.0
        %2092 = vmatprep.subr.mxu0 0.0
        %2093 = vmatpush1.msra.mxu0 0.0
        %2094 = vmatprep.subr.mxu0 0.0
        %2095 = vmatpush1.msra.mxu0 0.0
        %2096 = vmatprep.subr.mxu0 0.0
        %2097 = vmatpush1.msra.mxu0 0.0
        %2098 = vmatprep.subr.mxu0 0.0
        %2099 = vmatpush1.msra.mxu0 0.0
        %2100 = vmatprep.subr.mxu0 0.0
        %2101 = vmatpush1.msra.mxu0 0.0
        %2102 = vmatprep.subr.mxu0 0.0
        %2103 = vmatpush1.msra.mxu0 0.0
        %2104 = vmatprep.subr.mxu0 0.0
        %2105 = vmatpush1.msra.mxu0 0.0
        %2106 = vmatprep.subr.mxu0 0.0
        %2107 = vmatpush1.msra.mxu0 0.0
        %2108 = vmatprep.subr.mxu0 0.0
        %2109 = vmatpush1.msra.mxu0 0.0
        %2110 = vmatprep.subr.mxu0 0.0
        %2111 = vmatpush1.msra.mxu0 0.0
        %2112 = vmatprep.subr.mxu0 0.0
        %2113 = vmatpush1.msra.mxu0 0.0
        %2114 = vmatprep.subr.mxu0 0.0
        %2115 = vmatpush1.msra.mxu0 0.0
        %2116 = vmatprep.subr.mxu0 0.0
        %2117 = vmatpush1.msra.mxu0 0.0
        %2118 = vmatprep.subr.mxu0 0.0
        %2119 = vmatpush1.msra.mxu0 0.0
        %2120 = vmatprep.subr.mxu0 0.0
        %2121 = vmatpush1.msra.mxu0 0.0
        %2122 = vmatprep.subr.mxu0 0.0
        %2123 = vmatpush1.msra.mxu0 0.0
        %2124 = vmatprep.subr.mxu0 0.0
        %2125 = vmatpush1.msra.mxu0 0.0
        %2126 = vmatprep.subr.mxu0 0.0
        %2127 = vmatpush1.msra.mxu0 0.0
        %2128 = vmatprep.subr.mxu0 0.0
        %2129 = vmatpush1.msra.mxu0 0.0
        %2130 = vmatprep.subr.mxu0 0.0
        %2131 = vmatpush1.msra.mxu0 0.0
        %2132 = vmatprep.subr.mxu0 0.0
        %2133 = vmatpush1.msra.mxu0 0.0
        %2134 = vmatprep.subr.mxu0 0.0
        %2135 = vmatpush1.msra.mxu0 0.0
        %2136 = vmatprep.subr.mxu0 0.0
        %2137 = vmatpush1.msra.mxu0 0.0
        %2138 = vmatprep.subr.mxu0 0.0
        %2139 = vmatpush1.msra.mxu0 0.0
        %2140 = vmatprep.subr.mxu0 0.0
        %2141 = vmatpush1.msra.mxu0 0.0
        %2142 = vmatprep.subr.mxu0 0.0
        %2143 = vmatpush1.msra.mxu0 0.0
        %2144 = vmatprep.mubr.f32.mxu0 0.0
        %2145 = vmatmul.mubr.f32.gmra.mrb[0].mxu0 %v2033
        %v2146 = vpop.f32.mrb[0].mxu0
        %v2147 = vadd.f32 0.0, %v2146
        %v2148 = vpop.f32.mrb[0].mxu0
        %2149 = vmatprep.mubr.f32.mxu0 0.0
        %2150 = vmatmul.mubr.f32.gmra.mrb[0].mxu0 %v2036
        %v2151 = vpop.f32.mrb[0].mxu0
        %v2152 = vadd.f32 0.0, %v2151
        %v2153 = vpop.f32.mrb[0].mxu0
        %2154 = vmatprep.mubr.f32.mxu0 0.0
        %2155 = vmatmul.mubr.f32.gmra.mrb[0].mxu0 %v2039
        %v2156 = vpop.f32.mrb[0].mxu0
        %v2157 = vadd.f32 0.0, %v2156
        %v2158 = vpop.f32.mrb[0].mxu0
        %2159 = vmatprep.mubr.f32.mxu0 0.0
        %2160 = vmatmul.mubr.f32.gmra.mrb[0].mxu0 %v2042
        %v2161 = vpop.f32.mrb[0].mxu0
        %v2162 = vadd.f32 0.0, %v2161
        %v2163 = vpop.f32.mrb[0].mxu0
        %2164 = vmatprep.mubr.f32.mxu0 0.0
        %2165 = vmatmul.mubr.f32.gmra.mrb[0].mxu0 %v2045
        %v2166 = vpop.f32.mrb[0].mxu0
        %v2167 = vadd.f32 0.0, %v2166
        %v2168 = vpop.f32.mrb[0].mxu0
        %2169 = vmatprep.mubr.f32.mxu0 0.0
        %2170 = vmatmul.mubr.f32.gmra.mrb[0].mxu0 %v2048
        %v2171 = vpop.f32.mrb[0].mxu0
        %v2172 = vadd.f32 0.0, %v2171
        %v2173 = vpop.f32.mrb[0].mxu0
        %2174 = vmatprep.mubr.f32.mxu0 0.0
        %2175 = vmatmul.mubr.f32.gmra.mrb[0].mxu0 %v2051
        %v2176 = vpop.f32.mrb[0].mxu0
        %v2177 = vadd.f32 0.0, %v2176
        %v2178 = vpop.f32.mrb[0].mxu0
        %2179 = vmatprep.mubr.f32.mxu0 0.0
        %2180 = vmatmul.mubr.f32.gmra.mrb[0].mxu0 %v2054
        %v2181 = vpop.f32.mrb[0].mxu0
        %v2182 = vadd.f32 0.0, %v2181
        %v2183 = vpop.f32.mrb[0].mxu0
        %2184 = vmatprep.mubr.f32.mxu0 0.0
        %2185 = vmatmul.mubr.f32.gmra.mrb[0].mxu0 %v2057
        %v2186 = vpop.f32.mrb[0].mxu0
        %v2187 = vadd.f32 0.0, %v2186
        %v2188 = vpop.f32.mrb[0].mxu0
        %2189 = vmatprep.mubr.f32.mxu0 0.0
        %2190 = vmatmul.mubr.f32.gmra.mrb[0].mxu0 %v2060
        %v2191 = vpop.f32.mrb[0].mxu0
        %v2192 = vadd.f32 0.0, %v2191
        %v2193 = vpop.f32.mrb[0].mxu0
        %2194 = vmatprep.mubr.f32.mxu0 0.0
        %2195 = vmatmul.mubr.f32.gmra.mrb[0].mxu0 %v2063
        %v2196 = vpop.f32.mrb[0].mxu0
        %v2197 = vadd.f32 0.0, %v2196
        %v2198 = vpop.f32.mrb[0].mxu0
        %2199 = vmatprep.mubr.f32.mxu0 0.0
        %2200 = vmatmul.mubr.f32.gmra.mrb[0].mxu0 %v2066
        %v2201 = vpop.f32.mrb[0].mxu0
        %v2202 = vadd.f32 0.0, %v2201
        %v2203 = vpop.f32.mrb[0].mxu0
        %2204 = vmatprep.mubr.f32.mxu0 0.0
        %2205 = vmatmul.mubr.f32.gmra.mrb[0].mxu0 %v2069
        %v2206 = vpop.f32.mrb[0].mxu0
        %v2207 = vadd.f32 0.0, %v2206
        %v2208 = vpop.f32.mrb[0].mxu0
        %2209 = vmatprep.mubr.f32.mxu0 0.0
        %2210 = vmatmul.mubr.f32.gmra.mrb[0].mxu0 %v2072
        %v2211 = vpop.f32.mrb[0].mxu0
        %v2212 = vadd.f32 0.0, %v2211
        %v2213 = vpop.f32.mrb[0].mxu0
        %2214 = vmatprep.mubr.f32.mxu0 0.0
        %2215 = vmatmul.mubr.f32.gmra.mrb[0].mxu0 %v2075
        %v2216 = vpop.f32.mrb[0].mxu0
        %v2217 = vadd.f32 0.0, %v2216
        %v2218 = vpop.f32.mrb[0].mxu0
        %2219 = vmatprep.mubr.f32.mxu0 0.0
        %2220 = vmatmul.mubr.f32.gmra.mrb[0].mxu0 %v2078
        %v2221 = vpop.f32.mrb[0].mxu0
        %v2222 = vadd.f32 0.0, %v2221
        %v2223 = vpop.f32.mrb[0].mxu0
        %2224 = vdwg.mxu0
        %vm2225 = vcmp.gt.f32.partialorder %v2147, 0.0
        %vm2226 = vcmp.gt.f32.partialorder %v2152, 0.0
        %vm2227 = vcmp.gt.f32.partialorder %v2157, 0.0
        %vm2228 = vcmp.gt.f32.partialorder %v2162, 0.0
        %vm2229 = vcmp.gt.f32.partialorder %v2167, 0.0
        %vm2230 = vcmp.gt.f32.partialorder %v2172, 0.0
        %vm2231 = vcmp.gt.f32.partialorder %v2177, 0.0
        %vm2232 = vcmp.gt.f32.partialorder %v2182, 0.0
        %vm2233 = vcmp.gt.f32.partialorder %v2187, 0.0
        %vm2234 = vcmp.gt.f32.partialorder %v2192, 0.0
        %vm2235 = vcmp.gt.f32.partialorder %v2197, 0.0
        %vm2236 = vcmp.gt.f32.partialorder %v2202, 0.0
        %vm2237 = vcmp.gt.f32.partialorder %v2207, 0.0
        %vm2238 = vcmp.gt.f32.partialorder %v2212, 0.0
        %vm2239 = vcmp.gt.f32.partialorder %v2217, 0.0
        %vm2240 = vcmp.gt.f32.partialorder %v2222, 0.0
        %v2241 = vmul.f32 %v2147, 0.01
        %v2242 = vmul.f32 %v2152, 0.01
        %v2243 = vmul.f32 %v2157, 0.01
        %v2244 = vmul.f32 %v2162, 0.01
        %v2245 = vmul.f32 %v2167, 0.01
        %v2246 = vmul.f32 %v2172, 0.01
        %v2247 = vmul.f32 %v2177, 0.01
        %v2248 = vmul.f32 %v2182, 0.01
        %v2249 = vmul.f32 %v2187, 0.01
        %v2250 = vmul.f32 %v2192, 0.01
        %v2251 = vmul.f32 %v2197, 0.01
        %v2252 = vmul.f32 %v2202, 0.01
        %v2253 = vmul.f32 %v2207, 0.01
        %v2254 = vmul.f32 %v2212, 0.01
        %v2255 = vmul.f32 %v2217, 0.01
        %v2256 = vmul.f32 %v2222, 0.01
        %v2257 = vsel %vm2225, %v2147, %v2241
        %v2258 = vsel %vm2226, %v2152, %v2242
        %v2259 = vsel %vm2227, %v2157, %v2243
        %v2260 = vsel %vm2228, %v2162, %v2244
        %v2261 = vsel %vm2229, %v2167, %v2245
        %v2262 = vsel %vm2230, %v2172, %v2246
        %v2263 = vsel %vm2231, %v2177, %v2247
        %v2264 = vsel %vm2232, %v2182, %v2248
        %v2265 = vsel %vm2233, %v2187, %v2249
        %v2266 = vsel %vm2234, %v2192, %v2250
        %v2267 = vsel %vm2235, %v2197, %v2251
        %v2268 = vsel %vm2236, %v2202, %v2252
        %v2269 = vsel %vm2237, %v2207, %v2253
        %v2270 = vsel %vm2238, %v2212, %v2254
        %v2271 = vsel %vm2239, %v2217, %v2255
        %v2272 = vsel %vm2240, %v2222, %v2256
        %vm2273 = vcmask 15360
        %2274 = vst.msk [vmem:[%s663] sm:$0xff] %vm2273, %v2257
        %2275 = vst.msk [vmem:[%s663 + $0x8] sm:$0xff] %vm2273, %v2258
        %2276 = vst.msk [vmem:[%s663 + $0x10] sm:$0xff] %vm2273, %v2259
        %2277 = vst.msk [vmem:[%s663 + $0x18] sm:$0xff] %vm2273, %v2260
        %2278 = vst.msk [vmem:[%s663 + $0x20] sm:$0xff] %vm2273, %v2261
        %2279 = vst.msk [vmem:[%s663 + $0x28] sm:$0xff] %vm2273, %v2262
        %2280 = vst.msk [vmem:[%s663 + $0x30] sm:$0xff] %vm2273, %v2263
        %2281 = vst.msk [vmem:[%s663 + $0x38] sm:$0xff] %vm2273, %v2264
        %2282 = vst.msk [vmem:[%s663 + $0x40] sm:$0xff] %vm2273, %v2265
        %2283 = vst.msk [vmem:[%s663 + $0x48] sm:$0xff] %vm2273, %v2266
        %2284 = vst.msk [vmem:[%s663 + $0x50] sm:$0xff] %vm2273, %v2267
        %2285 = vst.msk [vmem:[%s663 + $0x58] sm:$0xff] %vm2273, %v2268
        %2286 = vst.msk [vmem:[%s663 + $0x60] sm:$0xff] %vm2273, %v2269
        %2287 = vst.msk [vmem:[%s663 + $0x68] sm:$0xff] %vm2273, %v2270
        %2288 = vst.msk [vmem:[%s663 + $0x70] sm:$0xff] %vm2273, %v2271
        %2289 = vst.msk [vmem:[%s663 + $0x78] sm:$0xff] %vm2273, %v2272
        %s2290 = smul.u32 16, %s23
        %p2291 = scmp.lt.s32.totalorder %s22, 2
        %s2292 = scalar_select %p2291, %s22, 2
        %p2293 = scmp.lt.s32.totalorder %s2290, 31
        %s2294 = scalar_select %p2293, %s2290, 31
        %s2295 = smul.addr %s2292, 32
        %s2296 = sadd.s32 %s2294, %s2295
        %s2297 = smul.addr %s2296, 8
        %s2298 = scalar_lea.vmem %s5, %s2297
        %s2299 = smul.u32 16, %s23
        %p2300 = scmp.lt.s32.totalorder %s22, 2
        %s2301 = scalar_select %p2300, %s22, 2
        %p2302 = scmp.lt.s32.totalorder %s2299, 31
        %s2303 = scalar_select %p2302, %s2299, 31
        %s2304 = smul.addr %s2301, 32
        %s2305 = sadd.s32 %s2303, %s2304
        %s2306 = smul.addr %s2305, 8
        %s2307 = scalar_lea.vmem %s6, %s2306
        // Predicated region
        $region79: #{tpu_custom_call.1} parent=73 // pred_check
          %p2308 = pneg %p182
        $region80: #{tpu_custom_call.1} parent=73 // pred_check_branch
          %2310 = sbr.rel (%p2308) target = $region82
        $region81: #{tpu_custom_call.1} parent=73 // pred_region
          %s2311 = smul.u32 16, %s23
        $region82: #{tpu_custom_call.1} parent=73 // pred_fallthru
          _
        // Predicated region
        $region83: #{tpu_custom_call.1} parent=73 // pred_check
          %p2312 = pneg %p210
        $region84: #{tpu_custom_call.1} parent=73 // pred_check_branch
          %2314 = sbr.rel (%p2312) target = $region86
        $region85: #{tpu_custom_call.1} parent=73 // pred_region
          %s2315 = smul.u32 16, %s23
        $region86: #{tpu_custom_call.1} parent=73 // pred_fallthru
          _
      $region74: #{tpu_custom_call.1} parent=5 // pred_fallthru
        _
      %p2316 = scmp.le.s32.totalorder 2, %s13
      // Predicated region
      $region87: #{tpu_custom_call.1} parent=5 // pred_check
        %p2317 = pneg %p2316
      $region88: #{tpu_custom_call.1} parent=5 // pred_check_branch
        %2319 = sbr.rel (%p2317) target = $region90
      $region89: #{tpu_custom_call.1} parent=5 // pred_region
        %s2320 = ssub.s32 %s13, 2
        // Predicated region
        $region91: #{tpu_custom_call.1} parent=89 // pred_check
          %p2321 = pneg %p188
        $region92: #{tpu_custom_call.1} parent=89 // pred_check_branch
          %2323 = sbr.rel (%p2321) target = $region94
        $region93: #{tpu_custom_call.1} parent=89 // pred_region
          %s2324 = smul.u32 16, %s25
          %p2325 = scmp.lt.s32.totalorder %s24, 2
          %s2326 = scalar_select %p2325, %s24, 2
          %p2327 = scmp.lt.s32.totalorder %s2324, 31
          %s2328 = scalar_select %p2327, %s2324, 31
          %s2329 = smul.addr %s2326, 32
          %s2330 = sadd.s32 %s2328, %s2329
          %s2331 = smul.addr %s2330, 8
          %s2332 = scalar_lea.vmem %s5, %s2331
        $region94: #{tpu_custom_call.1} parent=89 // pred_fallthru
          _
        // Predicated region
        $region95: #{tpu_custom_call.1} parent=89 // pred_check
          %p2333 = pneg %p216
        $region96: #{tpu_custom_call.1} parent=89 // pred_check_branch
          %2335 = sbr.rel (%p2333) target = $region98
        $region97: #{tpu_custom_call.1} parent=89 // pred_region
          %s2336 = smul.u32 16, %s25
          %p2337 = scmp.lt.s32.totalorder %s24, 2
          %s2338 = scalar_select %p2337, %s24, 2
          %p2339 = scmp.lt.s32.totalorder %s2336, 31
          %s2340 = scalar_select %p2339, %s2336, 31
          %s2341 = smul.addr %s2338, 32
          %s2342 = sadd.s32 %s2340, %s2341
          %s2343 = smul.addr %s2342, 8
          %s2344 = scalar_lea.vmem %s6, %s2343
        $region98: #{tpu_custom_call.1} parent=89 // pred_fallthru
          _
      $region90: #{tpu_custom_call.1} parent=5 // pred_fallthru
        _
    $region6: #{tpu_custom_call.1} parent=1 // loop_footer
      %s17 = sadd.s32 1, %s13
    $region7: #{tpu_custom_call.1} parent=1 // loop_footer_branch
      %12 = sbr.rel target = $region3
    $region8: #{tpu_custom_call.1} parent=1 // loop_exit
      _

</llo_original>
